<compile_context>
chip_gen: v7x
topology: tpu7x:2x2x1
jax: 0.10.0
libtpu: 0.0.40
codegen_flags: <defaults>
</compile_context>

<pallas_src>
import functools
import math

import jax
import jax.numpy as jnp
from jax import lax
from jax.experimental import pallas as pl
from jax.experimental.pallas import tpu as pltpu

# ---- small synthetic BERT config ----
VOCAB = 100
TYPE_VOCAB = 2
MAX_POS = 16
HIDDEN = 32
N_HEADS = 2
HEAD_DIM = HIDDEN // N_HEADS
INTER = 64
N_LAYERS = 2
LN_EPS = 1e-12
NEG_INF = -1e9

# f32 matmul operands by default (matches f32 reference numerics exactly).
# TODO(synk): set to jnp.bfloat16 on v6e/v7x if tolerance allows.
MATMUL_DTYPE = jnp.float32


def _layernorm(x, g, b):
    mu = jnp.mean(x, axis=-1, keepdims=True)
    var = jnp.mean(jnp.square(x - mu), axis=-1, keepdims=True)
    return (x - mu) * lax.rsqrt(var + LN_EPS) * g + b


def _mm(a, b):
    """Plain 2-D MXU matmul, f32 accumulation."""
    return jnp.dot(a.astype(MATMUL_DTYPE), b.astype(MATMUL_DTYPE),
                   preferred_element_type=jnp.float32)


def _mm_nt(a, b):
    """a @ b.T via dot_general (contract last dims) — no materialized transpose."""
    return lax.dot_general(a.astype(MATMUL_DTYPE), b.astype(MATMUL_DTYPE),
                           (((1,), (1,)), ((), ())),
                           preferred_element_type=jnp.float32)


# ------------- fused encoder kernel: embedding LN + all layers + average -------------
def _fused_bert_kernel(emb_ref, bidc_ref, bidr_ref, valid_ref, eg_ref, eb_ref,
                       wqkv_ref, bqkv_ref, wo_ref, bo_ref,
                       ln1g_ref, ln1b_ref, w1_ref, b1_ref, w2_ref, b2_ref,
                       ln2g_ref, ln2b_ref, o_ref,
                       *, n_layers, n_heads, head_dim, inv_num_hidden_states):
    hidden = n_heads * head_dim

    # (M, M) additive attention bias, built ONCE from O(M) vectors:
    # 0 where query & key belong to the same batch element and the key is a
    # real (non-padding) token, NEG_INF otherwise. The cross-batch blocking
    # makes folding the whole batch into one attention block exact.
    same_batch = bidc_ref[...] == bidr_ref[...]           # (M,1) vs (1,M) -> (M,M)
    key_valid = valid_ref[...] > 0.5                      # (1, M)
    bias = jnp.where(jnp.logical_and(same_batch, key_valid),
                     0.0, NEG_INF).astype(jnp.float32)

    # Embedding LayerNorm = hidden_states[0].
    h0 = _layernorm(emb_ref[...], eg_ref[...], eb_ref[...])

    def one_layer(l, carry):
        h, h_sum = carry

        # Fused QKV projection: one (M, H) @ (H, 3H) dot.
        # 1/sqrt(head_dim) is already folded into Wq/bq host-side.
        qkv = _mm(h, wqkv_ref[l]) + bqkv_ref[l]           # (M, 3H)

        # Per-head attention with plain 2-D dots (n_heads is tiny & static).
        ctx_heads = []
        for hh in range(n_heads):
            lo, hi = hh * head_dim, (hh + 1) * head_dim
            q = qkv[:, lo:hi]                              # (M, hd)
            k = qkv[:, hidden + lo:hidden + hi]            # (M, hd)
            v = qkv[:, 2 * hidden + lo:2 * hidden + hi]    # (M, hd)
            s = _mm_nt(q, k) + bias                        # (M, M)
            s = s - jnp.max(s, axis=-1, keepdims=True)
            p = jnp.exp(s)
            p = p / jnp.sum(p, axis=-1, keepdims=True)     # exact divide
            ctx_heads.append(_mm(p, v))                    # (M, hd)

        # Single output projection against the un-split Wo: (M, H) @ (H, H).
        ctx = jnp.concatenate(ctx_heads, axis=-1)          # (M, H)
        attn = _mm(ctx, wo_ref[l]) + bo_ref[l]
        h1 = _layernorm(h + attn, ln1g_ref[l], ln1b_ref[l])

        # Feed-forward.
        ff = _mm(h1, w1_ref[l]) + b1_ref[l]
        # TODO(synk): HF BERT uses exact (erf) GELU; tanh-approx kept for a
        # guaranteed-clean Mosaic lowering.
        ff = jax.nn.gelu(ff, approximate=True)
        ff = _mm(ff, w2_ref[l]) + b2_ref[l]
        h2 = _layernorm(h1 + ff, ln2g_ref[l], ln2b_ref[l])

        return h2, h_sum + h2

    _, h_sum = lax.fori_loop(0, n_layers, one_layer, (h0, h0), unroll=True)

    # Uniform weighted average over all (n_layers + 1) hidden states.
    o_ref[...] = (h_sum * inv_num_hidden_states).astype(o_ref.dtype)


def fused_bert_encoder(emb2, bid_col, bid_row, valid_row, emb_ln_g, emb_ln_b, sp):
    M, H = emb2.shape
    L = sp["wqkv"].shape[0]

    kernel = functools.partial(
        _fused_bert_kernel, n_layers=L, n_heads=N_HEADS, head_dim=HEAD_DIM,
        inv_num_hidden_states=1.0 / (L + 1))

    operands = (emb2, bid_col, bid_row, valid_row, emb_ln_g, emb_ln_b,
                sp["wqkv"], sp["bqkv"], sp["wo"], sp["bo"],
                sp["ln1_g"], sp["ln1_b"], sp["w1"], sp["b1"],
                sp["w2"], sp["b2"], sp["ln2_g"], sp["ln2_b"])

    vmem_full = pl.BlockSpec(memory_space=pltpu.MemorySpace.VMEM)
    return pl.pallas_call(
        kernel,
        out_shape=jax.ShapeDtypeStruct((M, H), jnp.float32),
        in_specs=[vmem_full] * len(operands),
        out_specs=vmem_full,
    )(*operands)


# ---------------- parameter init (deterministic, synthetic) ----------------
def init_params(key):
    keys = iter(jax.random.split(key, 128))
    norm = lambda shape: 0.02 * jax.random.normal(next(keys), shape, dtype=jnp.float32)
    ones = lambda shape: jnp.ones(shape, jnp.float32)
    zeros = lambda shape: jnp.zeros(shape, jnp.float32)
    params = {
        "word_emb": norm((VOCAB, HIDDEN)),
        "pos_emb": norm((MAX_POS, HIDDEN)),
        "type_emb": norm((TYPE_VOCAB, HIDDEN)),
        "emb_ln_g": ones((1, HIDDEN)), "emb_ln_b": zeros((1, HIDDEN)),
        "layers": [],
    }
    for _ in range(N_LAYERS):
        params["layers"].append({
            "wq": norm((HIDDEN, HIDDEN)), "bq": zeros((1, HIDDEN)),
            "wk": norm((HIDDEN, HIDDEN)), "bk": zeros((1, HIDDEN)),
            "wv": norm((HIDDEN, HIDDEN)), "bv": zeros((1, HIDDEN)),
            "wo": norm((HIDDEN, HIDDEN)), "bo": zeros((1, HIDDEN)),
            "ln1_g": ones((1, HIDDEN)), "ln1_b": zeros((1, HIDDEN)),
            "w1": norm((HIDDEN, INTER)), "b1": zeros((1, INTER)),
            "w2": norm((INTER, HIDDEN)), "b2": zeros((1, HIDDEN)),
            "ln2_g": ones((1, HIDDEN)), "ln2_b": zeros((1, HIDDEN)),
        })
    return params


def stack_params(params):
    """One-time host-side weight transform.

    * Stack per-layer weights over L.
    * Fuse Wq|Wk|Wv -> (L, H, 3H) and bq|bk|bv -> (L, 1, 3H).
    * Fold 1/sqrt(head_dim) into the Wq / bq slices (so the kernel has no
      per-layer score-scale multiply).
    Wo stays un-split: the kernel does a single (M, H) @ (H, H) dot.
    """
    layers = params["layers"]
    scale = 1.0 / math.sqrt(HEAD_DIM)

    def stk(name):
        return jnp.stack([lp[name] for lp in layers], axis=0)

    wqkv = jnp.concatenate([stk("wq") * scale, stk("wk"), stk("wv")], axis=-1)
    bqkv = jnp.concatenate([stk("bq") * scale, stk("bk"), stk("bv")], axis=-1)
    return {
        "wqkv": wqkv, "bqkv": bqkv,
        "wo": stk("wo"), "bo": stk("bo"),
        "ln1_g": stk("ln1_g"), "ln1_b": stk("ln1_b"),
        "w1": stk("w1"), "b1": stk("b1"),
        "w2": stk("w2"), "b2": stk("b2"),
        "ln2_g": stk("ln2_g"), "ln2_b": stk("ln2_b"),
    }


# ---------------- BERTEncoder.forward equivalent ----------------
def bert_encoder_forward(token, att_mask, params, stacked):
    B, S = token.shape
    M = B * S

    # embeddings: word + position + token-type (all type 0) — plain-JAX gathers
    positions = jnp.arange(S)
    emb = (params["word_emb"][token]
           + params["pos_emb"][positions][None, :, :]
           + params["type_emb"][jnp.zeros_like(token)])
    emb2 = emb.reshape(M, HIDDEN).astype(jnp.float32)

    # O(M) vectors from which the kernel builds the (M, M) additive bias.
    batch_ids = (jnp.arange(M, dtype=jnp.int32) // S).astype(jnp.float32)
    bid_col = batch_ids.reshape(M, 1)
    bid_row = batch_ids.reshape(1, M)
    valid_row = att_mask.reshape(1, M).astype(jnp.float32)

    out2 = fused_bert_encoder(emb2, bid_col, bid_row, valid_row,
                              params["emb_ln_g"], params["emb_ln_b"], stacked)
    return out2.reshape(B, S, HIDDEN)


# ---------------- pure-JAX reference (standard per-head formulation) ----------------
def _bert_reference(token, att_mask, params):
    B, S = token.shape
    positions = jnp.arange(S)
    emb = (params["word_emb"][token]
           + params["pos_emb"][positions][None, :, :]
           + params["type_emb"][jnp.zeros_like(token)]).astype(jnp.float32)

    def ln(x, g, b):
        mu = jnp.mean(x, axis=-1, keepdims=True)
        var = jnp.mean(jnp.square(x - mu), axis=-1, keepdims=True)
        return (x - mu) / jnp.sqrt(var + LN_EPS) * g + b

    h = ln(emb, params["emb_ln_g"], params["emb_ln_b"])
    bias = jnp.where(att_mask[:, None, None, :] > 0, 0.0, NEG_INF)
    states = [h]
    for lp in params["layers"]:
        def split(x):
            return x.reshape(B, S, N_HEADS, HEAD_DIM).transpose(0, 2, 1, 3)
        q = split(h @ lp["wq"] + lp["bq"])
        k = split(h @ lp["wk"] + lp["bk"])
        v = split(h @ lp["wv"] + lp["bv"])
        s = jnp.einsum('bhqd,bhkd->bhqk', q, k) / math.sqrt(HEAD_DIM) + bias
        p = jax.nn.softmax(s, axis=-1)
        ctx = jnp.einsum('bhqk,bhkd->bhqd', p, v).transpose(0, 2, 1, 3)
        ctx = ctx.reshape(B, S, HIDDEN)
        attn = ctx @ lp["wo"] + lp["bo"]
        h1 = ln(h + attn, lp["ln1_g"], lp["ln1_b"])
        ff = jax.nn.gelu(h1 @ lp["w1"] + lp["b1"], approximate=True)
        ff = ff @ lp["w2"] + lp["b2"]
        h = ln(h1 + ff, lp["ln2_g"], lp["ln2_b"])
        states.append(h)
    return sum(states) / len(states)


if __name__ == "__main__":
    key = jax.random.PRNGKey(0)
    pkey, tkey = jax.random.split(key)
    params = init_params(pkey)
    stacked = stack_params(params)

    B, S = 2, 8
    token = jax.random.randint(tkey, (B, S), 0, VOCAB, dtype=jnp.int32)
    att_mask = jnp.ones((B, S), dtype=jnp.int32).at[1, 6:].set(0)  # pad last 2 of row 1

    out = bert_encoder_forward(token, att_mask, params, stacked)
    out = jax.block_until_ready(out)
    assert out.shape == (B, S, HIDDEN) and out.dtype == jnp.float32

    # sanity check against a plain-JAX reference of the same forward pass
    ref = _bert_reference(token, att_mask, params)
    max_err = float(jnp.max(jnp.abs(out - ref)))
    assert max_err < 1e-2, f"kernel/reference mismatch: max abs err {max_err}"

    print("KERNEL_OK")
</pallas_src>

<mosaic_0001>
module attributes {stable_mosaic.version = 11 : i64} {
  func.func @_fused_bert_kernel(%arg0: memref<16x32xf32, #tpu.memory_space<vmem>>, %arg1: memref<16x1xf32, #tpu.memory_space<vmem>>, %arg2: memref<1x16xf32, #tpu.memory_space<vmem>>, %arg3: memref<1x16xf32, #tpu.memory_space<vmem>>, %arg4: memref<1x32xf32, #tpu.memory_space<vmem>>, %arg5: memref<1x32xf32, #tpu.memory_space<vmem>>, %arg6: memref<2x32x96xf32, #tpu.memory_space<vmem>>, %arg7: memref<2x1x96xf32, #tpu.memory_space<vmem>>, %arg8: memref<2x32x32xf32, #tpu.memory_space<vmem>>, %arg9: memref<2x1x32xf32, #tpu.memory_space<vmem>>, %arg10: memref<2x1x32xf32, #tpu.memory_space<vmem>>, %arg11: memref<2x1x32xf32, #tpu.memory_space<vmem>>, %arg12: memref<2x32x64xf32, #tpu.memory_space<vmem>>, %arg13: memref<2x1x64xf32, #tpu.memory_space<vmem>>, %arg14: memref<2x64x32xf32, #tpu.memory_space<vmem>>, %arg15: memref<2x1x32xf32, #tpu.memory_space<vmem>>, %arg16: memref<2x1x32xf32, #tpu.memory_space<vmem>>, %arg17: memref<2x1x32xf32, #tpu.memory_space<vmem>>, %arg18: memref<16x32xf32, #tpu.memory_space<vmem>>) attributes {dimension_semantics = [], scalar_prefetch = 0 : i64, scratch_operands = 0 : i64, tpu.core_type = #tpu.core_type<tc>} {
    %c0 = arith.constant 0 : index
    %c0_0 = arith.constant 0 : index
    %0 = vector.load %arg1[%c0, %c0_0] : memref<16x1xf32, #tpu.memory_space<vmem>>, vector<16x1xf32>
    %c0_1 = arith.constant 0 : index
    %c0_2 = arith.constant 0 : index
    %1 = vector.load %arg2[%c0_1, %c0_2] : memref<1x16xf32, #tpu.memory_space<vmem>>, vector<1x16xf32>
    %2 = vector.broadcast %0 : vector<16x1xf32> to vector<16x16xf32>
    %3 = vector.broadcast %1 : vector<1x16xf32> to vector<16x16xf32>
    %4 = arith.cmpf oeq, %2, %3 : vector<16x16xf32>
    %c0_3 = arith.constant 0 : index
    %c0_4 = arith.constant 0 : index
    %5 = vector.load %arg3[%c0_3, %c0_4] : memref<1x16xf32, #tpu.memory_space<vmem>>, vector<1x16xf32>
    %cst = arith.constant 5.000000e-01 : f32
    %6 = vector.broadcast %cst : f32 to vector<1x16xf32>
    %7 = arith.cmpf ogt, %5, %6 : vector<1x16xf32>
    %8 = vector.broadcast %7 : vector<1x16xi1> to vector<16x16xi1>
    %9 = arith.andi %4, %8 : vector<16x16xi1>
    %cst_5 = arith.constant 0.000000e+00 : f32
    %cst_6 = arith.constant -1.000000e+09 : f32
    %10 = vector.broadcast %cst_5 : f32 to vector<16x16xf32>
    %11 = vector.broadcast %cst_6 : f32 to vector<16x16xf32>
    %12 = arith.select %9, %10, %11 : vector<16x16xi1>, vector<16x16xf32>
    %c0_7 = arith.constant 0 : index
    %c0_8 = arith.constant 0 : index
    %13 = vector.load %arg0[%c0_7, %c0_8] : memref<16x32xf32, #tpu.memory_space<vmem>>, vector<16x32xf32>
    %c0_9 = arith.constant 0 : index
    %c0_10 = arith.constant 0 : index
    %14 = vector.load %arg4[%c0_9, %c0_10] : memref<1x32xf32, #tpu.memory_space<vmem>>, vector<1x32xf32>
    %c0_11 = arith.constant 0 : index
    %c0_12 = arith.constant 0 : index
    %15 = vector.load %arg5[%c0_11, %c0_12] : memref<1x32xf32, #tpu.memory_space<vmem>>, vector<1x32xf32>
    %cst_13 = arith.constant dense<0.000000e+00> : vector<16xf32>
    %16 = vector.multi_reduction <add>, %13, %cst_13 [1] : vector<16x32xf32> to vector<16xf32>
    %17 = vector.shape_cast %16 : vector<16xf32> to vector<16x1xf32>
    %cst_14 = arith.constant 3.200000e+01 : f32
    %18 = vector.broadcast %cst_14 : f32 to vector<16x1xf32>
    %19 = arith.divf %17, %18 : vector<16x1xf32>
    %20 = vector.broadcast %19 : vector<16x1xf32> to vector<16x32xf32>
    %21 = arith.subf %13, %20 : vector<16x32xf32>
    %22 = arith.mulf %21, %21 : vector<16x32xf32>
    %cst_15 = arith.constant dense<0.000000e+00> : vector<16xf32>
    %23 = vector.multi_reduction <add>, %22, %cst_15 [1] : vector<16x32xf32> to vector<16xf32>
    %24 = vector.shape_cast %23 : vector<16xf32> to vector<16x1xf32>
    %cst_16 = arith.constant 3.200000e+01 : f32
    %25 = vector.broadcast %cst_16 : f32 to vector<16x1xf32>
    %26 = arith.divf %24, %25 : vector<16x1xf32>
    %27 = vector.broadcast %19 : vector<16x1xf32> to vector<16x32xf32>
    %28 = arith.subf %13, %27 : vector<16x32xf32>
    %cst_17 = arith.constant 9.99999996E-13 : f32
    %29 = vector.broadcast %cst_17 : f32 to vector<16x1xf32>
    %30 = arith.addf %26, %29 : vector<16x1xf32>
    %31 = math.rsqrt %30 : vector<16x1xf32>
    %32 = vector.broadcast %31 : vector<16x1xf32> to vector<16x32xf32>
    %33 = arith.mulf %28, %32 : vector<16x32xf32>
    %34 = vector.broadcast %14 : vector<1x32xf32> to vector<16x32xf32>
    %35 = arith.mulf %33, %34 : vector<16x32xf32>
    %36 = vector.broadcast %15 : vector<1x32xf32> to vector<16x32xf32>
    %37 = arith.addf %35, %36 : vector<16x32xf32>
    %c0_i32 = arith.constant 0 : i32
    %38 = arith.index_cast %c0_i32 : i32 to index
    %c0_18 = arith.constant 0 : index
    %c0_19 = arith.constant 0 : index
    %39 = vector.load %arg6[%38, %c0_18, %c0_19] : memref<2x32x96xf32, #tpu.memory_space<vmem>>, vector<1x32x96xf32>
    %40 = vector.shape_cast %39 : vector<1x32x96xf32> to vector<32x96xf32>
    %cst_20 = arith.constant dense<0.000000e+00> : vector<16x96xf32>
    %41 = tpu.matmul %37, %40, %cst_20 {dimension_numbers = #tpu.dot_dimension_numbers<[1], [0], [0], [1], [0, 0, 1, 1], [], []>} : vector<16x32xf32>, vector<32x96xf32>, vector<16x96xf32> -> vector<16x96xf32>
    %42 = arith.index_cast %c0_i32 : i32 to index
    %c0_21 = arith.constant 0 : index
    %c0_22 = arith.constant 0 : index
    %43 = vector.load %arg7[%42, %c0_21, %c0_22] : memref<2x1x96xf32, #tpu.memory_space<vmem>>, vector<1x1x96xf32>
    %44 = vector.shape_cast %43 : vector<1x1x96xf32> to vector<1x96xf32>
    %45 = vector.broadcast %44 : vector<1x96xf32> to vector<16x96xf32>
    %46 = arith.addf %41, %45 : vector<16x96xf32>
    %47 = vector.extract_strided_slice %46 {offsets = [0, 0], sizes = [16, 16], strides = [1, 1]} : vector<16x96xf32> to vector<16x16xf32>
    %48 = vector.extract_strided_slice %46 {offsets = [0, 32], sizes = [16, 16], strides = [1, 1]} : vector<16x96xf32> to vector<16x16xf32>
    %49 = vector.extract_strided_slice %46 {offsets = [0, 64], sizes = [16, 16], strides = [1, 1]} : vector<16x96xf32> to vector<16x16xf32>
    %cst_23 = arith.constant dense<0.000000e+00> : vector<16x16xf32>
    %50 = tpu.matmul %47, %48, %cst_23 {dimension_numbers = #tpu.dot_dimension_numbers<[1], [1], [0], [0], [0, 0, 1, 0], [], []>} : vector<16x16xf32>, vector<16x16xf32>, vector<16x16xf32> -> vector<16x16xf32>
    %51 = arith.addf %50, %12 : vector<16x16xf32>
    %cst_24 = arith.constant dense<0xFF800000> : vector<16xf32>
    %52 = vector.multi_reduction <maximumf>, %51, %cst_24 [1] : vector<16x16xf32> to vector<16xf32>
    %53 = vector.shape_cast %52 : vector<16xf32> to vector<16x1xf32>
    %54 = vector.broadcast %53 : vector<16x1xf32> to vector<16x16xf32>
    %55 = arith.subf %51, %54 : vector<16x16xf32>
    %56 = math.exp %55 : vector<16x16xf32>
    %cst_25 = arith.constant dense<0.000000e+00> : vector<16xf32>
    %57 = vector.multi_reduction <add>, %56, %cst_25 [1] : vector<16x16xf32> to vector<16xf32>
    %58 = vector.shape_cast %57 : vector<16xf32> to vector<16x1xf32>
    %59 = vector.broadcast %58 : vector<16x1xf32> to vector<16x16xf32>
    %60 = arith.divf %56, %59 : vector<16x16xf32>
    %cst_26 = arith.constant dense<0.000000e+00> : vector<16x16xf32>
    %61 = tpu.matmul %60, %49, %cst_26 {dimension_numbers = #tpu.dot_dimension_numbers<[1], [0], [0], [1], [0, 0, 1, 1], [], []>} : vector<16x16xf32>, vector<16x16xf32>, vector<16x16xf32> -> vector<16x16xf32>
    %62 = vector.extract_strided_slice %46 {offsets = [0, 16], sizes = [16, 16], strides = [1, 1]} : vector<16x96xf32> to vector<16x16xf32>
    %63 = vector.extract_strided_slice %46 {offsets = [0, 48], sizes = [16, 16], strides = [1, 1]} : vector<16x96xf32> to vector<16x16xf32>
    %64 = vector.extract_strided_slice %46 {offsets = [0, 80], sizes = [16, 16], strides = [1, 1]} : vector<16x96xf32> to vector<16x16xf32>
    %cst_27 = arith.constant dense<0.000000e+00> : vector<16x16xf32>
    %65 = tpu.matmul %62, %63, %cst_27 {dimension_numbers = #tpu.dot_dimension_numbers<[1], [1], [0], [0], [0, 0, 1, 0], [], []>} : vector<16x16xf32>, vector<16x16xf32>, vector<16x16xf32> -> vector<16x16xf32>
    %66 = arith.addf %65, %12 : vector<16x16xf32>
    %cst_28 = arith.constant dense<0xFF800000> : vector<16xf32>
    %67 = vector.multi_reduction <maximumf>, %66, %cst_28 [1] : vector<16x16xf32> to vector<16xf32>
    %68 = vector.shape_cast %67 : vector<16xf32> to vector<16x1xf32>
    %69 = vector.broadcast %68 : vector<16x1xf32> to vector<16x16xf32>
    %70 = arith.subf %66, %69 : vector<16x16xf32>
    %71 = math.exp %70 : vector<16x16xf32>
    %cst_29 = arith.constant dense<0.000000e+00> : vector<16xf32>
    %72 = vector.multi_reduction <add>, %71, %cst_29 [1] : vector<16x16xf32> to vector<16xf32>
    %73 = vector.shape_cast %72 : vector<16xf32> to vector<16x1xf32>
    %74 = vector.broadcast %73 : vector<16x1xf32> to vector<16x16xf32>
    %75 = arith.divf %71, %74 : vector<16x16xf32>
    %cst_30 = arith.constant dense<0.000000e+00> : vector<16x16xf32>
    %76 = tpu.matmul %75, %64, %cst_30 {dimension_numbers = #tpu.dot_dimension_numbers<[1], [0], [0], [1], [0, 0, 1, 1], [], []>} : vector<16x16xf32>, vector<16x16xf32>, vector<16x16xf32> -> vector<16x16xf32>
    %77 = tpu.concatenate %61, %76 in 1 : vector<16x16xf32>, vector<16x16xf32> -> vector<16x32xf32>
    %78 = arith.index_cast %c0_i32 : i32 to index
    %c0_31 = arith.constant 0 : index
    %c0_32 = arith.constant 0 : index
    %79 = vector.load %arg8[%78, %c0_31, %c0_32] : memref<2x32x32xf32, #tpu.memory_space<vmem>>, vector<1x32x32xf32>
    %80 = vector.shape_cast %79 : vector<1x32x32xf32> to vector<32x32xf32>
    %cst_33 = arith.constant dense<0.000000e+00> : vector<16x32xf32>
    %81 = tpu.matmul %77, %80, %cst_33 {dimension_numbers = #tpu.dot_dimension_numbers<[1], [0], [0], [1], [0, 0, 1, 1], [], []>} : vector<16x32xf32>, vector<32x32xf32>, vector<16x32xf32> -> vector<16x32xf32>
    %82 = arith.index_cast %c0_i32 : i32 to index
    %c0_34 = arith.constant 0 : index
    %c0_35 = arith.constant 0 : index
    %83 = vector.load %arg9[%82, %c0_34, %c0_35] : memref<2x1x32xf32, #tpu.memory_space<vmem>>, vector<1x1x32xf32>
    %84 = vector.shape_cast %83 : vector<1x1x32xf32> to vector<1x32xf32>
    %85 = vector.broadcast %84 : vector<1x32xf32> to vector<16x32xf32>
    %86 = arith.addf %81, %85 : vector<16x32xf32>
    %87 = arith.addf %37, %86 : vector<16x32xf32>
    %88 = arith.index_cast %c0_i32 : i32 to index
    %c0_36 = arith.constant 0 : index
    %c0_37 = arith.constant 0 : index
    %89 = vector.load %arg10[%88, %c0_36, %c0_37] : memref<2x1x32xf32, #tpu.memory_space<vmem>>, vector<1x1x32xf32>
    %90 = vector.shape_cast %89 : vector<1x1x32xf32> to vector<1x32xf32>
    %91 = arith.index_cast %c0_i32 : i32 to index
    %c0_38 = arith.constant 0 : index
    %c0_39 = arith.constant 0 : index
    %92 = vector.load %arg11[%91, %c0_38, %c0_39] : memref<2x1x32xf32, #tpu.memory_space<vmem>>, vector<1x1x32xf32>
    %93 = vector.shape_cast %92 : vector<1x1x32xf32> to vector<1x32xf32>
    %cst_40 = arith.constant dense<0.000000e+00> : vector<16xf32>
    %94 = vector.multi_reduction <add>, %87, %cst_40 [1] : vector<16x32xf32> to vector<16xf32>
    %95 = vector.shape_cast %94 : vector<16xf32> to vector<16x1xf32>
    %cst_41 = arith.constant 3.200000e+01 : f32
    %96 = vector.broadcast %cst_41 : f32 to vector<16x1xf32>
    %97 = arith.divf %95, %96 : vector<16x1xf32>
    %98 = vector.broadcast %97 : vector<16x1xf32> to vector<16x32xf32>
    %99 = arith.subf %87, %98 : vector<16x32xf32>
    %100 = arith.mulf %99, %99 : vector<16x32xf32>
    %cst_42 = arith.constant dense<0.000000e+00> : vector<16xf32>
    %101 = vector.multi_reduction <add>, %100, %cst_42 [1] : vector<16x32xf32> to vector<16xf32>
    %102 = vector.shape_cast %101 : vector<16xf32> to vector<16x1xf32>
    %cst_43 = arith.constant 3.200000e+01 : f32
    %103 = vector.broadcast %cst_43 : f32 to vector<16x1xf32>
    %104 = arith.divf %102, %103 : vector<16x1xf32>
    %105 = vector.broadcast %97 : vector<16x1xf32> to vector<16x32xf32>
    %106 = arith.subf %87, %105 : vector<16x32xf32>
    %cst_44 = arith.constant 9.99999996E-13 : f32
    %107 = vector.broadcast %cst_44 : f32 to vector<16x1xf32>
    %108 = arith.addf %104, %107 : vector<16x1xf32>
    %109 = math.rsqrt %108 : vector<16x1xf32>
    %110 = vector.broadcast %109 : vector<16x1xf32> to vector<16x32xf32>
    %111 = arith.mulf %106, %110 : vector<16x32xf32>
    %112 = vector.broadcast %90 : vector<1x32xf32> to vector<16x32xf32>
    %113 = arith.mulf %111, %112 : vector<16x32xf32>
    %114 = vector.broadcast %93 : vector<1x32xf32> to vector<16x32xf32>
    %115 = arith.addf %113, %114 : vector<16x32xf32>
    %116 = arith.index_cast %c0_i32 : i32 to index
    %c0_45 = arith.constant 0 : index
    %c0_46 = arith.constant 0 : index
    %117 = vector.load %arg12[%116, %c0_45, %c0_46] : memref<2x32x64xf32, #tpu.memory_space<vmem>>, vector<1x32x64xf32>
    %118 = vector.shape_cast %117 : vector<1x32x64xf32> to vector<32x64xf32>
    %cst_47 = arith.constant dense<0.000000e+00> : vector<16x64xf32>
    %119 = tpu.matmul %115, %118, %cst_47 {dimension_numbers = #tpu.dot_dimension_numbers<[1], [0], [0], [1], [0, 0, 1, 1], [], []>} : vector<16x32xf32>, vector<32x64xf32>, vector<16x64xf32> -> vector<16x64xf32>
    %120 = arith.index_cast %c0_i32 : i32 to index
    %c0_48 = arith.constant 0 : index
    %c0_49 = arith.constant 0 : index
    %121 = vector.load %arg13[%120, %c0_48, %c0_49] : memref<2x1x64xf32, #tpu.memory_space<vmem>>, vector<1x1x64xf32>
    %122 = vector.shape_cast %121 : vector<1x1x64xf32> to vector<1x64xf32>
    %123 = vector.broadcast %122 : vector<1x64xf32> to vector<16x64xf32>
    %124 = arith.addf %119, %123 : vector<16x64xf32>
    %125 = arith.mulf %124, %124 : vector<16x64xf32>
    %126 = arith.mulf %124, %125 : vector<16x64xf32>
    %cst_50 = arith.constant 4.471500e-02 : f32
    %127 = vector.broadcast %cst_50 : f32 to vector<16x64xf32>
    %128 = arith.mulf %127, %126 : vector<16x64xf32>
    %129 = arith.addf %124, %128 : vector<16x64xf32>
    %cst_51 = arith.constant 0.797884583 : f32
    %130 = vector.broadcast %cst_51 : f32 to vector<16x64xf32>
    %131 = arith.mulf %130, %129 : vector<16x64xf32>
    %132 = math.tanh %131 : vector<16x64xf32>
    %cst_52 = arith.constant 1.000000e+00 : f32
    %133 = vector.broadcast %cst_52 : f32 to vector<16x64xf32>
    %134 = arith.addf %133, %132 : vector<16x64xf32>
    %cst_53 = arith.constant 5.000000e-01 : f32
    %135 = vector.broadcast %cst_53 : f32 to vector<16x64xf32>
    %136 = arith.mulf %135, %134 : vector<16x64xf32>
    %137 = arith.mulf %124, %136 : vector<16x64xf32>
    %138 = arith.index_cast %c0_i32 : i32 to index
    %c0_54 = arith.constant 0 : index
    %c0_55 = arith.constant 0 : index
    %139 = vector.load %arg14[%138, %c0_54, %c0_55] : memref<2x64x32xf32, #tpu.memory_space<vmem>>, vector<1x64x32xf32>
    %140 = vector.shape_cast %139 : vector<1x64x32xf32> to vector<64x32xf32>
    %cst_56 = arith.constant dense<0.000000e+00> : vector<16x32xf32>
    %141 = tpu.matmul %137, %140, %cst_56 {dimension_numbers = #tpu.dot_dimension_numbers<[1], [0], [0], [1], [0, 0, 1, 1], [], []>} : vector<16x64xf32>, vector<64x32xf32>, vector<16x32xf32> -> vector<16x32xf32>
    %142 = arith.index_cast %c0_i32 : i32 to index
    %c0_57 = arith.constant 0 : index
    %c0_58 = arith.constant 0 : index
    %143 = vector.load %arg15[%142, %c0_57, %c0_58] : memref<2x1x32xf32, #tpu.memory_space<vmem>>, vector<1x1x32xf32>
    %144 = vector.shape_cast %143 : vector<1x1x32xf32> to vector<1x32xf32>
    %145 = vector.broadcast %144 : vector<1x32xf32> to vector<16x32xf32>
    %146 = arith.addf %141, %145 : vector<16x32xf32>
    %147 = arith.addf %115, %146 : vector<16x32xf32>
    %148 = arith.index_cast %c0_i32 : i32 to index
    %c0_59 = arith.constant 0 : index
    %c0_60 = arith.constant 0 : index
    %149 = vector.load %arg16[%148, %c0_59, %c0_60] : memref<2x1x32xf32, #tpu.memory_space<vmem>>, vector<1x1x32xf32>
    %150 = vector.shape_cast %149 : vector<1x1x32xf32> to vector<1x32xf32>
    %151 = arith.index_cast %c0_i32 : i32 to index
    %c0_61 = arith.constant 0 : index
    %c0_62 = arith.constant 0 : index
    %152 = vector.load %arg17[%151, %c0_61, %c0_62] : memref<2x1x32xf32, #tpu.memory_space<vmem>>, vector<1x1x32xf32>
    %153 = vector.shape_cast %152 : vector<1x1x32xf32> to vector<1x32xf32>
    %cst_63 = arith.constant dense<0.000000e+00> : vector<16xf32>
    %154 = vector.multi_reduction <add>, %147, %cst_63 [1] : vector<16x32xf32> to vector<16xf32>
    %155 = vector.shape_cast %154 : vector<16xf32> to vector<16x1xf32>
    %cst_64 = arith.constant 3.200000e+01 : f32
    %156 = vector.broadcast %cst_64 : f32 to vector<16x1xf32>
    %157 = arith.divf %155, %156 : vector<16x1xf32>
    %158 = vector.broadcast %157 : vector<16x1xf32> to vector<16x32xf32>
    %159 = arith.subf %147, %158 : vector<16x32xf32>
    %160 = arith.mulf %159, %159 : vector<16x32xf32>
    %cst_65 = arith.constant dense<0.000000e+00> : vector<16xf32>
    %161 = vector.multi_reduction <add>, %160, %cst_65 [1] : vector<16x32xf32> to vector<16xf32>
    %162 = vector.shape_cast %161 : vector<16xf32> to vector<16x1xf32>
    %cst_66 = arith.constant 3.200000e+01 : f32
    %163 = vector.broadcast %cst_66 : f32 to vector<16x1xf32>
    %164 = arith.divf %162, %163 : vector<16x1xf32>
    %165 = vector.broadcast %157 : vector<16x1xf32> to vector<16x32xf32>
    %166 = arith.subf %147, %165 : vector<16x32xf32>
    %cst_67 = arith.constant 9.99999996E-13 : f32
    %167 = vector.broadcast %cst_67 : f32 to vector<16x1xf32>
    %168 = arith.addf %164, %167 : vector<16x1xf32>
    %169 = math.rsqrt %168 : vector<16x1xf32>
    %170 = vector.broadcast %169 : vector<16x1xf32> to vector<16x32xf32>
    %171 = arith.mulf %166, %170 : vector<16x32xf32>
    %172 = vector.broadcast %150 : vector<1x32xf32> to vector<16x32xf32>
    %173 = arith.mulf %171, %172 : vector<16x32xf32>
    %174 = vector.broadcast %153 : vector<1x32xf32> to vector<16x32xf32>
    %175 = arith.addf %173, %174 : vector<16x32xf32>
    %176 = arith.addf %37, %175 : vector<16x32xf32>
    %c1_i32 = arith.constant 1 : i32
    %177 = arith.index_cast %c1_i32 : i32 to index
    %c0_68 = arith.constant 0 : index
    %c0_69 = arith.constant 0 : index
    %178 = vector.load %arg6[%177, %c0_68, %c0_69] : memref<2x32x96xf32, #tpu.memory_space<vmem>>, vector<1x32x96xf32>
    %179 = vector.shape_cast %178 : vector<1x32x96xf32> to vector<32x96xf32>
    %cst_70 = arith.constant dense<0.000000e+00> : vector<16x96xf32>
    %180 = tpu.matmul %175, %179, %cst_70 {dimension_numbers = #tpu.dot_dimension_numbers<[1], [0], [0], [1], [0, 0, 1, 1], [], []>} : vector<16x32xf32>, vector<32x96xf32>, vector<16x96xf32> -> vector<16x96xf32>
    %181 = arith.index_cast %c1_i32 : i32 to index
    %c0_71 = arith.constant 0 : index
    %c0_72 = arith.constant 0 : index
    %182 = vector.load %arg7[%181, %c0_71, %c0_72] : memref<2x1x96xf32, #tpu.memory_space<vmem>>, vector<1x1x96xf32>
    %183 = vector.shape_cast %182 : vector<1x1x96xf32> to vector<1x96xf32>
    %184 = vector.broadcast %183 : vector<1x96xf32> to vector<16x96xf32>
    %185 = arith.addf %180, %184 : vector<16x96xf32>
    %186 = vector.extract_strided_slice %185 {offsets = [0, 0], sizes = [16, 16], strides = [1, 1]} : vector<16x96xf32> to vector<16x16xf32>
    %187 = vector.extract_strided_slice %185 {offsets = [0, 32], sizes = [16, 16], strides = [1, 1]} : vector<16x96xf32> to vector<16x16xf32>
    %188 = vector.extract_strided_slice %185 {offsets = [0, 64], sizes = [16, 16], strides = [1, 1]} : vector<16x96xf32> to vector<16x16xf32>
    %cst_73 = arith.constant dense<0.000000e+00> : vector<16x16xf32>
    %189 = tpu.matmul %186, %187, %cst_73 {dimension_numbers = #tpu.dot_dimension_numbers<[1], [1], [0], [0], [0, 0, 1, 0], [], []>} : vector<16x16xf32>, vector<16x16xf32>, vector<16x16xf32> -> vector<16x16xf32>
    %190 = arith.addf %189, %12 : vector<16x16xf32>
    %cst_74 = arith.constant dense<0xFF800000> : vector<16xf32>
    %191 = vector.multi_reduction <maximumf>, %190, %cst_74 [1] : vector<16x16xf32> to vector<16xf32>
    %192 = vector.shape_cast %191 : vector<16xf32> to vector<16x1xf32>
    %193 = vector.broadcast %192 : vector<16x1xf32> to vector<16x16xf32>
    %194 = arith.subf %190, %193 : vector<16x16xf32>
    %195 = math.exp %194 : vector<16x16xf32>
    %cst_75 = arith.constant dense<0.000000e+00> : vector<16xf32>
    %196 = vector.multi_reduction <add>, %195, %cst_75 [1] : vector<16x16xf32> to vector<16xf32>
    %197 = vector.shape_cast %196 : vector<16xf32> to vector<16x1xf32>
    %198 = vector.broadcast %197 : vector<16x1xf32> to vector<16x16xf32>
    %199 = arith.divf %195, %198 : vector<16x16xf32>
    %cst_76 = arith.constant dense<0.000000e+00> : vector<16x16xf32>
    %200 = tpu.matmul %199, %188, %cst_76 {dimension_numbers = #tpu.dot_dimension_numbers<[1], [0], [0], [1], [0, 0, 1, 1], [], []>} : vector<16x16xf32>, vector<16x16xf32>, vector<16x16xf32> -> vector<16x16xf32>
    %201 = vector.extract_strided_slice %185 {offsets = [0, 16], sizes = [16, 16], strides = [1, 1]} : vector<16x96xf32> to vector<16x16xf32>
    %202 = vector.extract_strided_slice %185 {offsets = [0, 48], sizes = [16, 16], strides = [1, 1]} : vector<16x96xf32> to vector<16x16xf32>
    %203 = vector.extract_strided_slice %185 {offsets = [0, 80], sizes = [16, 16], strides = [1, 1]} : vector<16x96xf32> to vector<16x16xf32>
    %cst_77 = arith.constant dense<0.000000e+00> : vector<16x16xf32>
    %204 = tpu.matmul %201, %202, %cst_77 {dimension_numbers = #tpu.dot_dimension_numbers<[1], [1], [0], [0], [0, 0, 1, 0], [], []>} : vector<16x16xf32>, vector<16x16xf32>, vector<16x16xf32> -> vector<16x16xf32>
    %205 = arith.addf %204, %12 : vector<16x16xf32>
    %cst_78 = arith.constant dense<0xFF800000> : vector<16xf32>
    %206 = vector.multi_reduction <maximumf>, %205, %cst_78 [1] : vector<16x16xf32> to vector<16xf32>
    %207 = vector.shape_cast %206 : vector<16xf32> to vector<16x1xf32>
    %208 = vector.broadcast %207 : vector<16x1xf32> to vector<16x16xf32>
    %209 = arith.subf %205, %208 : vector<16x16xf32>
    %210 = math.exp %209 : vector<16x16xf32>
    %cst_79 = arith.constant dense<0.000000e+00> : vector<16xf32>
    %211 = vector.multi_reduction <add>, %210, %cst_79 [1] : vector<16x16xf32> to vector<16xf32>
    %212 = vector.shape_cast %211 : vector<16xf32> to vector<16x1xf32>
    %213 = vector.broadcast %212 : vector<16x1xf32> to vector<16x16xf32>
    %214 = arith.divf %210, %213 : vector<16x16xf32>
    %cst_80 = arith.constant dense<0.000000e+00> : vector<16x16xf32>
    %215 = tpu.matmul %214, %203, %cst_80 {dimension_numbers = #tpu.dot_dimension_numbers<[1], [0], [0], [1], [0, 0, 1, 1], [], []>} : vector<16x16xf32>, vector<16x16xf32>, vector<16x16xf32> -> vector<16x16xf32>
    %216 = tpu.concatenate %200, %215 in 1 : vector<16x16xf32>, vector<16x16xf32> -> vector<16x32xf32>
    %217 = arith.index_cast %c1_i32 : i32 to index
    %c0_81 = arith.constant 0 : index
    %c0_82 = arith.constant 0 : index
    %218 = vector.load %arg8[%217, %c0_81, %c0_82] : memref<2x32x32xf32, #tpu.memory_space<vmem>>, vector<1x32x32xf32>
    %219 = vector.shape_cast %218 : vector<1x32x32xf32> to vector<32x32xf32>
    %cst_83 = arith.constant dense<0.000000e+00> : vector<16x32xf32>
    %220 = tpu.matmul %216, %219, %cst_83 {dimension_numbers = #tpu.dot_dimension_numbers<[1], [0], [0], [1], [0, 0, 1, 1], [], []>} : vector<16x32xf32>, vector<32x32xf32>, vector<16x32xf32> -> vector<16x32xf32>
    %221 = arith.index_cast %c1_i32 : i32 to index
    %c0_84 = arith.constant 0 : index
    %c0_85 = arith.constant 0 : index
    %222 = vector.load %arg9[%221, %c0_84, %c0_85] : memref<2x1x32xf32, #tpu.memory_space<vmem>>, vector<1x1x32xf32>
    %223 = vector.shape_cast %222 : vector<1x1x32xf32> to vector<1x32xf32>
    %224 = vector.broadcast %223 : vector<1x32xf32> to vector<16x32xf32>
    %225 = arith.addf %220, %224 : vector<16x32xf32>
    %226 = arith.addf %175, %225 : vector<16x32xf32>
    %227 = arith.index_cast %c1_i32 : i32 to index
    %c0_86 = arith.constant 0 : index
    %c0_87 = arith.constant 0 : index
    %228 = vector.load %arg10[%227, %c0_86, %c0_87] : memref<2x1x32xf32, #tpu.memory_space<vmem>>, vector<1x1x32xf32>
    %229 = vector.shape_cast %228 : vector<1x1x32xf32> to vector<1x32xf32>
    %230 = arith.index_cast %c1_i32 : i32 to index
    %c0_88 = arith.constant 0 : index
    %c0_89 = arith.constant 0 : index
    %231 = vector.load %arg11[%230, %c0_88, %c0_89] : memref<2x1x32xf32, #tpu.memory_space<vmem>>, vector<1x1x32xf32>
    %232 = vector.shape_cast %231 : vector<1x1x32xf32> to vector<1x32xf32>
    %cst_90 = arith.constant dense<0.000000e+00> : vector<16xf32>
    %233 = vector.multi_reduction <add>, %226, %cst_90 [1] : vector<16x32xf32> to vector<16xf32>
    %234 = vector.shape_cast %233 : vector<16xf32> to vector<16x1xf32>
    %cst_91 = arith.constant 3.200000e+01 : f32
    %235 = vector.broadcast %cst_91 : f32 to vector<16x1xf32>
    %236 = arith.divf %234, %235 : vector<16x1xf32>
    %237 = vector.broadcast %236 : vector<16x1xf32> to vector<16x32xf32>
    %238 = arith.subf %226, %237 : vector<16x32xf32>
    %239 = arith.mulf %238, %238 : vector<16x32xf32>
    %cst_92 = arith.constant dense<0.000000e+00> : vector<16xf32>
    %240 = vector.multi_reduction <add>, %239, %cst_92 [1] : vector<16x32xf32> to vector<16xf32>
    %241 = vector.shape_cast %240 : vector<16xf32> to vector<16x1xf32>
    %cst_93 = arith.constant 3.200000e+01 : f32
    %242 = vector.broadcast %cst_93 : f32 to vector<16x1xf32>
    %243 = arith.divf %241, %242 : vector<16x1xf32>
    %244 = vector.broadcast %236 : vector<16x1xf32> to vector<16x32xf32>
    %245 = arith.subf %226, %244 : vector<16x32xf32>
    %cst_94 = arith.constant 9.99999996E-13 : f32
    %246 = vector.broadcast %cst_94 : f32 to vector<16x1xf32>
    %247 = arith.addf %243, %246 : vector<16x1xf32>
    %248 = math.rsqrt %247 : vector<16x1xf32>
    %249 = vector.broadcast %248 : vector<16x1xf32> to vector<16x32xf32>
    %250 = arith.mulf %245, %249 : vector<16x32xf32>
    %251 = vector.broadcast %229 : vector<1x32xf32> to vector<16x32xf32>
    %252 = arith.mulf %250, %251 : vector<16x32xf32>
    %253 = vector.broadcast %232 : vector<1x32xf32> to vector<16x32xf32>
    %254 = arith.addf %252, %253 : vector<16x32xf32>
    %255 = arith.index_cast %c1_i32 : i32 to index
    %c0_95 = arith.constant 0 : index
    %c0_96 = arith.constant 0 : index
    %256 = vector.load %arg12[%255, %c0_95, %c0_96] : memref<2x32x64xf32, #tpu.memory_space<vmem>>, vector<1x32x64xf32>
    %257 = vector.shape_cast %256 : vector<1x32x64xf32> to vector<32x64xf32>
    %cst_97 = arith.constant dense<0.000000e+00> : vector<16x64xf32>
    %258 = tpu.matmul %254, %257, %cst_97 {dimension_numbers = #tpu.dot_dimension_numbers<[1], [0], [0], [1], [0, 0, 1, 1], [], []>} : vector<16x32xf32>, vector<32x64xf32>, vector<16x64xf32> -> vector<16x64xf32>
    %259 = arith.index_cast %c1_i32 : i32 to index
    %c0_98 = arith.constant 0 : index
    %c0_99 = arith.constant 0 : index
    %260 = vector.load %arg13[%259, %c0_98, %c0_99] : memref<2x1x64xf32, #tpu.memory_space<vmem>>, vector<1x1x64xf32>
    %261 = vector.shape_cast %260 : vector<1x1x64xf32> to vector<1x64xf32>
    %262 = vector.broadcast %261 : vector<1x64xf32> to vector<16x64xf32>
    %263 = arith.addf %258, %262 : vector<16x64xf32>
    %264 = arith.mulf %263, %263 : vector<16x64xf32>
    %265 = arith.mulf %263, %264 : vector<16x64xf32>
    %cst_100 = arith.constant 4.471500e-02 : f32
    %266 = vector.broadcast %cst_100 : f32 to vector<16x64xf32>
    %267 = arith.mulf %266, %265 : vector<16x64xf32>
    %268 = arith.addf %263, %267 : vector<16x64xf32>
    %cst_101 = arith.constant 0.797884583 : f32
    %269 = vector.broadcast %cst_101 : f32 to vector<16x64xf32>
    %270 = arith.mulf %269, %268 : vector<16x64xf32>
    %271 = math.tanh %270 : vector<16x64xf32>
    %cst_102 = arith.constant 1.000000e+00 : f32
    %272 = vector.broadcast %cst_102 : f32 to vector<16x64xf32>
    %273 = arith.addf %272, %271 : vector<16x64xf32>
    %cst_103 = arith.constant 5.000000e-01 : f32
    %274 = vector.broadcast %cst_103 : f32 to vector<16x64xf32>
    %275 = arith.mulf %274, %273 : vector<16x64xf32>
    %276 = arith.mulf %263, %275 : vector<16x64xf32>
    %277 = arith.index_cast %c1_i32 : i32 to index
    %c0_104 = arith.constant 0 : index
    %c0_105 = arith.constant 0 : index
    %278 = vector.load %arg14[%277, %c0_104, %c0_105] : memref<2x64x32xf32, #tpu.memory_space<vmem>>, vector<1x64x32xf32>
    %279 = vector.shape_cast %278 : vector<1x64x32xf32> to vector<64x32xf32>
    %cst_106 = arith.constant dense<0.000000e+00> : vector<16x32xf32>
    %280 = tpu.matmul %276, %279, %cst_106 {dimension_numbers = #tpu.dot_dimension_numbers<[1], [0], [0], [1], [0, 0, 1, 1], [], []>} : vector<16x64xf32>, vector<64x32xf32>, vector<16x32xf32> -> vector<16x32xf32>
    %281 = arith.index_cast %c1_i32 : i32 to index
    %c0_107 = arith.constant 0 : index
    %c0_108 = arith.constant 0 : index
    %282 = vector.load %arg15[%281, %c0_107, %c0_108] : memref<2x1x32xf32, #tpu.memory_space<vmem>>, vector<1x1x32xf32>
    %283 = vector.shape_cast %282 : vector<1x1x32xf32> to vector<1x32xf32>
    %284 = vector.broadcast %283 : vector<1x32xf32> to vector<16x32xf32>
    %285 = arith.addf %280, %284 : vector<16x32xf32>
    %286 = arith.addf %254, %285 : vector<16x32xf32>
    %287 = arith.index_cast %c1_i32 : i32 to index
    %c0_109 = arith.constant 0 : index
    %c0_110 = arith.constant 0 : index
    %288 = vector.load %arg16[%287, %c0_109, %c0_110] : memref<2x1x32xf32, #tpu.memory_space<vmem>>, vector<1x1x32xf32>
    %289 = vector.shape_cast %288 : vector<1x1x32xf32> to vector<1x32xf32>
    %290 = arith.index_cast %c1_i32 : i32 to index
    %c0_111 = arith.constant 0 : index
    %c0_112 = arith.constant 0 : index
    %291 = vector.load %arg17[%290, %c0_111, %c0_112] : memref<2x1x32xf32, #tpu.memory_space<vmem>>, vector<1x1x32xf32>
    %292 = vector.shape_cast %291 : vector<1x1x32xf32> to vector<1x32xf32>
    %cst_113 = arith.constant dense<0.000000e+00> : vector<16xf32>
    %293 = vector.multi_reduction <add>, %286, %cst_113 [1] : vector<16x32xf32> to vector<16xf32>
    %294 = vector.shape_cast %293 : vector<16xf32> to vector<16x1xf32>
    %cst_114 = arith.constant 3.200000e+01 : f32
    %295 = vector.broadcast %cst_114 : f32 to vector<16x1xf32>
    %296 = arith.divf %294, %295 : vector<16x1xf32>
    %297 = vector.broadcast %296 : vector<16x1xf32> to vector<16x32xf32>
    %298 = arith.subf %286, %297 : vector<16x32xf32>
    %299 = arith.mulf %298, %298 : vector<16x32xf32>
    %cst_115 = arith.constant dense<0.000000e+00> : vector<16xf32>
    %300 = vector.multi_reduction <add>, %299, %cst_115 [1] : vector<16x32xf32> to vector<16xf32>
    %301 = vector.shape_cast %300 : vector<16xf32> to vector<16x1xf32>
    %cst_116 = arith.constant 3.200000e+01 : f32
    %302 = vector.broadcast %cst_116 : f32 to vector<16x1xf32>
    %303 = arith.divf %301, %302 : vector<16x1xf32>
    %304 = vector.broadcast %296 : vector<16x1xf32> to vector<16x32xf32>
    %305 = arith.subf %286, %304 : vector<16x32xf32>
    %cst_117 = arith.constant 9.99999996E-13 : f32
    %306 = vector.broadcast %cst_117 : f32 to vector<16x1xf32>
    %307 = arith.addf %303, %306 : vector<16x1xf32>
    %308 = math.rsqrt %307 : vector<16x1xf32>
    %309 = vector.broadcast %308 : vector<16x1xf32> to vector<16x32xf32>
    %310 = arith.mulf %305, %309 : vector<16x32xf32>
    %311 = vector.broadcast %289 : vector<1x32xf32> to vector<16x32xf32>
    %312 = arith.mulf %310, %311 : vector<16x32xf32>
    %313 = vector.broadcast %292 : vector<1x32xf32> to vector<16x32xf32>
    %314 = arith.addf %312, %313 : vector<16x32xf32>
    %315 = arith.addf %176, %314 : vector<16x32xf32>
    %c2_i32 = arith.constant 2 : i32
    %cst_118 = arith.constant 0.333333343 : f32
    %316 = vector.broadcast %cst_118 : f32 to vector<16x32xf32>
    %317 = arith.mulf %315, %316 : vector<16x32xf32>
    %c0_119 = arith.constant 0 : index
    %c0_120 = arith.constant 0 : index
    %318 = vector.load %arg18[%c0_119, %c0_120] : memref<16x32xf32, #tpu.memory_space<vmem>>, vector<16x32xf32>
    tpu.vector_store %arg18[%c0_119, %c0_120], %317 {strides = array<i32>} : memref<16x32xf32, #tpu.memory_space<vmem>>, vector<16x32xf32>,
    return
  }
}

</mosaic_0001>

<llo_original>
// kernel: tpu_custom_call.1
$region0: #{tpu_custom_call.1}
  #allocation0 [shape = 'u32[]', space=smem, size = 0x4, offset = 0x4, fixed_abs, tag = 'smem constant byte address 0x4 - core index']
  #allocation1 [shape = 'u32[144,128]{1,0:T(1,128)}', space=vmem, size = 0x12000, scoped, tag = 'internal scratch']
  %s0 = inlined_call_operand.hbm [shape: f32[16,32], index: 0, kind: input, shape index: {}]
  %s1 = inlined_call_operand.vmem [shape: f32[16,1], index: 1, kind: input, shape index: {}]
  %s2 = inlined_call_operand.hbm [shape: f32[1,16], index: 2, kind: input, shape index: {}]
  %s3 = inlined_call_operand.hbm [shape: f32[1,16], index: 3, kind: input, shape index: {}]
  %s4 = inlined_call_operand.hbm [shape: f32[1,32], index: 4, kind: input, shape index: {}]
  %s5 = inlined_call_operand.hbm [shape: f32[1,32], index: 5, kind: input, shape index: {}]
  %s6 = inlined_call_operand.vmem [shape: f32[2,32,96], index: 6, kind: input, shape index: {}]
  %s7 = inlined_call_operand.vmem [shape: f32[2,1,96], index: 7, kind: input, shape index: {}]
  %s8 = inlined_call_operand.vmem [shape: f32[2,32,32], index: 8, kind: input, shape index: {}]
  %s9 = inlined_call_operand.vmem [shape: f32[2,1,32], index: 9, kind: input, shape index: {}]
  %s10 = inlined_call_operand.vmem [shape: f32[2,1,32], index: 10, kind: input, shape index: {}]
  %s11 = inlined_call_operand.hbm [shape: f32[2,1,32], index: 11, kind: input, shape index: {}]
  %s12 = inlined_call_operand.vmem [shape: f32[2,32,64], index: 12, kind: input, shape index: {}]
  %s13 = inlined_call_operand.hbm [shape: f32[2,1,64], index: 13, kind: input, shape index: {}]
  %s14 = inlined_call_operand.vmem [shape: f32[2,64,32], index: 14, kind: input, shape index: {}]
  %s15 = inlined_call_operand.vmem [shape: f32[2,1,32], index: 15, kind: input, shape index: {}]
  %s16 = inlined_call_operand.vmem [shape: f32[2,1,32], index: 16, kind: input, shape index: {}]
  %s17 = inlined_call_operand.vmem [shape: f32[2,1,32], index: 17, kind: input, shape index: {}]
  %s18 = inlined_call_operand.hbm [shape: f32[16,32], index: 18, kind: output, shape index: {}]
  %s19 = sld [smem:[#allocation0]]
  $region110: #{tpu_custom_call.1} parent=0
    _
  %s21 = ssub.s32 1, %s19
  %s22 = scalar_select 0, %s21, %s19
  $region1: #{tpu_custom_call.1} parent=0
    #allocation2 [shape = 'u8[8192]{0}', space=vmem, size = 0x2000, scoped, tag = 'input window, operand 0, single buffered']
    #allocation3 [shape = 's32[1]{0}', space=sflag, size = 0x4, scoped, tag = 'scoped memory for tpu_custom_call.1']
    #allocation4 [shape = 's32[1]{0}', space=sflag, size = 0x4, scoped, tag = 'scoped memory for tpu_custom_call.1']
    #allocation5 [shape = 'u8[512]{0}', space=vmem, size = 0x400, scoped, tag = 'input window, operand 2, single buffered']
    #allocation6 [shape = 's32[1]{0}', space=sflag, size = 0x4, scoped, tag = 'scoped memory for tpu_custom_call.1']
    #allocation7 [shape = 'u8[512]{0}', space=vmem, size = 0x400, scoped, tag = 'input window, operand 3, single buffered']
    #allocation8 [shape = 'u8[512]{0}', space=vmem, size = 0x400, scoped, tag = 'input window, operand 4, single buffered']
    #allocation9 [shape = 's32[1]{0}', space=sflag, size = 0x4, scoped, tag = 'scoped memory for tpu_custom_call.1']
    #allocation10 [shape = 'u8[512]{0}', space=vmem, size = 0x400, scoped, tag = 'input window, operand 5, single buffered']
    #allocation11 [shape = 'u8[1024]{0}', space=vmem, size = 0x400, scoped, tag = 'input window, operand 11, single buffered']
    #allocation12 [shape = 's32[1]{0}', space=sflag, size = 0x4, scoped, tag = 'scoped memory for tpu_custom_call.1']
    #allocation13 [shape = 'u8[1024]{0}', space=vmem, size = 0x400, scoped, tag = 'input window, operand 13, single buffered']
    #allocation14 [shape = 'u8[8192]{0}', space=vmem, size = 0x2000, scoped, tag = 'output window, operand 0, single buffered']
    %23 = vsyncpa [#allocation3], 0
    %24 = vsyncpa [#allocation6], 0
    %25 = vsyncpa [#allocation9], 0
    %26 = vsyncpa [#allocation12], 0
    %27 = vsyncpa [#allocation4], 0
    // Predicated region
    $region2: #{tpu_custom_call.1} parent=1 // pred_check
      _
    $region3: #{tpu_custom_call.1} parent=1 // pred_check_branch
      %29 = sbr.rel (0) target = $region5
    $region4: #{tpu_custom_call.1} parent=1 // pred_region
      %s31 = ssub.s32 256, 256
      %32 = vsyncadd [#allocation3], %s31
      %s33 = sshll.u32 [#allocation2], 4
      %s34 = int_to_ptr.vmem [resolvable:$true] %s33
      %39 = dma.hbm_to_vmem [thread:$0]  %s0, 256, %s34, [#allocation3], 128, 128, 8
    $region5: #{tpu_custom_call.1} parent=1 // pred_fallthru
      _
    // Predicated region
    $region6: #{tpu_custom_call.1} parent=1 // pred_check
      _
    $region7: #{tpu_custom_call.1} parent=1 // pred_check_branch
      %41 = sbr.rel (0) target = $region9
    $region8: #{tpu_custom_call.1} parent=1 // pred_region
      _
    $region9: #{tpu_custom_call.1} parent=1 // pred_fallthru
      _
    // Predicated region
    $region10: #{tpu_custom_call.1} parent=1 // pred_check
      _
    $region11: #{tpu_custom_call.1} parent=1 // pred_check_branch
      %43 = sbr.rel (0) target = $region13
    $region12: #{tpu_custom_call.1} parent=1 // pred_region
      %s45 = ssub.s32 16, 16
      %46 = vsyncadd [#allocation6], %s45
      %s48 = sshll.u32 [#allocation5], 4
      %s49 = int_to_ptr.vmem [resolvable:$true] %s48
      %51 = dma.hbm_to_vmem [thread:$0]  %s2, 16, %s49, [#allocation6]
    $region13: #{tpu_custom_call.1} parent=1 // pred_fallthru
      _
    // Predicated region
    $region14: #{tpu_custom_call.1} parent=1 // pred_check
      _
    $region15: #{tpu_custom_call.1} parent=1 // pred_check_branch
      %53 = sbr.rel (0) target = $region17
    $region16: #{tpu_custom_call.1} parent=1 // pred_region
      %s55 = ssub.s32 16, 16
      %56 = vsyncadd [#allocation6], %s55
      %s58 = sshll.u32 [#allocation7], 4
      %s59 = int_to_ptr.vmem [resolvable:$true] %s58
      %61 = dma.hbm_to_vmem [thread:$0]  %s3, 16, %s59, [#allocation6]
    $region17: #{tpu_custom_call.1} parent=1 // pred_fallthru
      _
    // Predicated region
    $region18: #{tpu_custom_call.1} parent=1 // pred_check
      _
    $region19: #{tpu_custom_call.1} parent=1 // pred_check_branch
      %63 = sbr.rel (0) target = $region21
    $region20: #{tpu_custom_call.1} parent=1 // pred_region
      %s65 = ssub.s32 16, 16
      %66 = vsyncadd [#allocation9], %s65
      %s68 = sshll.u32 [#allocation8], 4
      %s69 = int_to_ptr.vmem [resolvable:$true] %s68
      %71 = dma.hbm_to_vmem [thread:$0]  %s4, 16, %s69, [#allocation9]
    $region21: #{tpu_custom_call.1} parent=1 // pred_fallthru
      _
    // Predicated region
    $region22: #{tpu_custom_call.1} parent=1 // pred_check
      _
    $region23: #{tpu_custom_call.1} parent=1 // pred_check_branch
      %73 = sbr.rel (0) target = $region25
    $region24: #{tpu_custom_call.1} parent=1 // pred_region
      %s75 = ssub.s32 16, 16
      %76 = vsyncadd [#allocation9], %s75
      %s78 = sshll.u32 [#allocation10], 4
      %s79 = int_to_ptr.vmem [resolvable:$true] %s78
      %81 = dma.hbm_to_vmem [thread:$0]  %s5, 16, %s79, [#allocation9]
    $region25: #{tpu_custom_call.1} parent=1 // pred_fallthru
      _
    // Predicated region
    $region26: #{tpu_custom_call.1} parent=1 // pred_check
      _
    $region27: #{tpu_custom_call.1} parent=1 // pred_check_branch
      %83 = sbr.rel (0) target = $region29
    $region28: #{tpu_custom_call.1} parent=1 // pred_region
      _
    $region29: #{tpu_custom_call.1} parent=1 // pred_fallthru
      _
    // Predicated region
    $region30: #{tpu_custom_call.1} parent=1 // pred_check
      _
    $region31: #{tpu_custom_call.1} parent=1 // pred_check_branch
      %85 = sbr.rel (0) target = $region33
    $region32: #{tpu_custom_call.1} parent=1 // pred_region
      _
    $region33: #{tpu_custom_call.1} parent=1 // pred_fallthru
      _
    // Predicated region
    $region34: #{tpu_custom_call.1} parent=1 // pred_check
      _
    $region35: #{tpu_custom_call.1} parent=1 // pred_check_branch
      %87 = sbr.rel (0) target = $region37
    $region36: #{tpu_custom_call.1} parent=1 // pred_region
      _
    $region37: #{tpu_custom_call.1} parent=1 // pred_fallthru
      _
    // Predicated region
    $region38: #{tpu_custom_call.1} parent=1 // pred_check
      _
    $region39: #{tpu_custom_call.1} parent=1 // pred_check_branch
      %89 = sbr.rel (0) target = $region41
    $region40: #{tpu_custom_call.1} parent=1 // pred_region
      _
    $region41: #{tpu_custom_call.1} parent=1 // pred_fallthru
      _
    // Predicated region
    $region42: #{tpu_custom_call.1} parent=1 // pred_check
      _
    $region43: #{tpu_custom_call.1} parent=1 // pred_check_branch
      %91 = sbr.rel (0) target = $region45
    $region44: #{tpu_custom_call.1} parent=1 // pred_region
      _
    $region45: #{tpu_custom_call.1} parent=1 // pred_fallthru
      _
    // Predicated region
    $region46: #{tpu_custom_call.1} parent=1 // pred_check
      _
    $region47: #{tpu_custom_call.1} parent=1 // pred_check_branch
      %93 = sbr.rel (0) target = $region49
    $region48: #{tpu_custom_call.1} parent=1 // pred_region
      %s95 = ssub.s32 32, 32
      %96 = vsyncadd [#allocation12], %s95
      %s97 = sshll.u32 [#allocation11], 4
      %s98 = int_to_ptr.vmem [resolvable:$true] %s97
      %103 = dma.hbm_to_vmem [thread:$0]  %s11, 32, %s98, [#allocation12], 16, 16, 1
    $region49: #{tpu_custom_call.1} parent=1 // pred_fallthru
      _
    // Predicated region
    $region50: #{tpu_custom_call.1} parent=1 // pred_check
      _
    $region51: #{tpu_custom_call.1} parent=1 // pred_check_branch
      %105 = sbr.rel (0) target = $region53
    $region52: #{tpu_custom_call.1} parent=1 // pred_region
      _
    $region53: #{tpu_custom_call.1} parent=1 // pred_fallthru
      _
    // Predicated region
    $region54: #{tpu_custom_call.1} parent=1 // pred_check
      _
    $region55: #{tpu_custom_call.1} parent=1 // pred_check_branch
      %107 = sbr.rel (0) target = $region57
    $region56: #{tpu_custom_call.1} parent=1 // pred_region
      %s109 = ssub.s32 32, 32
      %110 = vsyncadd [#allocation12], %s109
      %s111 = sshll.u32 [#allocation13], 4
      %s112 = int_to_ptr.vmem [resolvable:$true] %s111
      %117 = dma.hbm_to_vmem [thread:$0]  %s13, 32, %s112, [#allocation12], 16, 16, 1
    $region57: #{tpu_custom_call.1} parent=1 // pred_fallthru
      _
    // Predicated region
    $region58: #{tpu_custom_call.1} parent=1 // pred_check
      _
    $region59: #{tpu_custom_call.1} parent=1 // pred_check_branch
      %119 = sbr.rel (0) target = $region61
    $region60: #{tpu_custom_call.1} parent=1 // pred_region
      _
    $region61: #{tpu_custom_call.1} parent=1 // pred_fallthru
      _
    // Predicated region
    $region62: #{tpu_custom_call.1} parent=1 // pred_check
      _
    $region63: #{tpu_custom_call.1} parent=1 // pred_check_branch
      %121 = sbr.rel (0) target = $region65
    $region64: #{tpu_custom_call.1} parent=1 // pred_region
      _
    $region65: #{tpu_custom_call.1} parent=1 // pred_fallthru
      _
    // Predicated region
    $region66: #{tpu_custom_call.1} parent=1 // pred_check
      _
    $region67: #{tpu_custom_call.1} parent=1 // pred_check_branch
      %123 = sbr.rel (0) target = $region69
    $region68: #{tpu_custom_call.1} parent=1 // pred_region
      _
    $region69: #{tpu_custom_call.1} parent=1 // pred_fallthru
      _
    // Predicated region
    $region70: #{tpu_custom_call.1} parent=1 // pred_check
      _
    $region71: #{tpu_custom_call.1} parent=1 // pred_check_branch
      %125 = sbr.rel (0) target = $region73
    $region72: #{tpu_custom_call.1} parent=1 // pred_region
      _
    $region73: #{tpu_custom_call.1} parent=1 // pred_fallthru
      _
    // Predicated region
    $region74: #{tpu_custom_call.1} parent=1 // pred_check
      _
    $region75: #{tpu_custom_call.1} parent=1 // pred_check_branch
      %127 = sbr.rel (0) target = $region77
    $region76: #{tpu_custom_call.1} parent=1 // pred_region
      %128 = dma.done [#allocation3], 256
    $region77: #{tpu_custom_call.1} parent=1 // pred_fallthru
      _
    // Predicated region
    $region78: #{tpu_custom_call.1} parent=1 // pred_check
      _
    $region79: #{tpu_custom_call.1} parent=1 // pred_check_branch
      %130 = sbr.rel (0) target = $region81
    $region80: #{tpu_custom_call.1} parent=1 // pred_region
      %131 = dma.done [#allocation6], 16
    $region81: #{tpu_custom_call.1} parent=1 // pred_fallthru
      _
    // Predicated region
    $region82: #{tpu_custom_call.1} parent=1 // pred_check
      _
    $region83: #{tpu_custom_call.1} parent=1 // pred_check_branch
      %133 = sbr.rel (0) target = $region85
    $region84: #{tpu_custom_call.1} parent=1 // pred_region
      %134 = dma.done [#allocation6], 16
    $region85: #{tpu_custom_call.1} parent=1 // pred_fallthru
      _
    // Predicated region
    $region86: #{tpu_custom_call.1} parent=1 // pred_check
      _
    $region87: #{tpu_custom_call.1} parent=1 // pred_check_branch
      %136 = sbr.rel (0) target = $region89
    $region88: #{tpu_custom_call.1} parent=1 // pred_region
      %137 = dma.done [#allocation9], 16
    $region89: #{tpu_custom_call.1} parent=1 // pred_fallthru
      _
    // Predicated region
    $region90: #{tpu_custom_call.1} parent=1 // pred_check
      _
    $region91: #{tpu_custom_call.1} parent=1 // pred_check_branch
      %139 = sbr.rel (0) target = $region93
    $region92: #{tpu_custom_call.1} parent=1 // pred_region
      %140 = dma.done [#allocation9], 16
    $region93: #{tpu_custom_call.1} parent=1 // pred_fallthru
      _
    // Predicated region
    $region94: #{tpu_custom_call.1} parent=1 // pred_check
      _
    $region95: #{tpu_custom_call.1} parent=1 // pred_check_branch
      %142 = sbr.rel (0) target = $region97
    $region96: #{tpu_custom_call.1} parent=1 // pred_region
      %143 = dma.done [#allocation12], 32
    $region97: #{tpu_custom_call.1} parent=1 // pred_fallthru
      _
    // Predicated region
    $region98: #{tpu_custom_call.1} parent=1 // pred_check
      _
    $region99: #{tpu_custom_call.1} parent=1 // pred_check_branch
      %145 = sbr.rel (0) target = $region101
    $region100: #{tpu_custom_call.1} parent=1 // pred_region
      %146 = dma.done [#allocation12], 32
    $region101: #{tpu_custom_call.1} parent=1 // pred_fallthru
      _
    %v147 = vld [vmem:[%s1] sm:$0xff]
    %v148 = vld [vmem:[%s1 + $0x8] sm:$0xff]
    %v149 = vld [vmem:[#allocation5] sm:$0x1]
    %151 = vset.pattern.permute.xlu0 0
    %152 = vperm.xlu0 %151, %v147
    %v153 = vpop.permute.xlu0 %152
    %156 = vset.pattern.permute.xlu0 0
    %157 = vperm.xlu0 %156, %v148
    %v158 = vpop.permute.xlu0 %157
    %v161 = vlaneseq
    %v162 = vshrl.u32 %v161, 7
    %v163 = vsub.s32 0, %v162
    %v164 = vrot.slane %v149, %v163
    %vm166 = vcmp.eq.f32.partialorder %v153, %v164
    %vm167 = vcmp.eq.f32.partialorder %v158, %v164
    %v168 = vld [vmem:[#allocation7] sm:$0x1]
    %vm169 = vcmp.gt.f32.partialorder %v168, 0.5
    %v170 = vsel %vm169, 1, 0
    %v171 = vlaneseq
    %v172 = vshrl.u32 %v171, 7
    %v173 = vsub.s32 0, %v172
    %v174 = vrot.slane %v170, %v173
    %vm175 = vcmp.eq.s32.totalorder %v174, 1
    %vm176 = vmand %vm166, %vm175
    %vm177 = vmand %vm167, %vm175
    %v178 = vsel %vm176, 0.0, -1e+09
    %v179 = vsel %vm177, 0.0, -1e+09
    %v180 = vld [vmem:[#allocation2] sm:$0xff]
    %v181 = vld [vmem:[#allocation2 + $0x8] sm:$0xff]
    %v182 = vld [vmem:[#allocation8] sm:$0x1]
    %v183 = vld [vmem:[#allocation10] sm:$0x1]
    %vm184 = vcmask 261120
    %v185 = vsel %vm184, %v180, 0.0
    %186 = vadd.xlane.f32.xlu0 %v185
    %v187 = vpop.xlane.xlu0 %186
    %v188 = vsel %vm184, %v181, 0.0
    %189 = vadd.xlane.f32.xlu0 %v188
    %v190 = vpop.xlane.xlu0 %189
    %v191 = vrcp.pop 32.0
    %v192 = vmul.f32 %v187, %v191
    %v193 = vmul.f32 %v190, %v191
    %v194 = vsub.f32 %v180, %v192
    %v195 = vsub.f32 %v181, %v193
    %v196 = vmul.f32 %v194, %v194
    %v197 = vmul.f32 %v195, %v195
    %v198 = vsel %vm184, %v196, 0.0
    %199 = vadd.xlane.f32.xlu0 %v198
    %v200 = vpop.xlane.xlu0 %199
    %v201 = vsel %vm184, %v197, 0.0
    %202 = vadd.xlane.f32.xlu0 %v201
    %v203 = vpop.xlane.xlu0 %202
    %v204 = vmul.f32 %v200, %v191
    %v205 = vmul.f32 %v203, %v191
    %v206 = vadd.f32 %v204, 1e-12
    %v207 = vadd.f32 %v205, 1e-12
    %v208 = vrsqrt.pop %v206
    %v209 = vrsqrt.pop %v207
    %v210 = vmul.f32 %v194, %v208
    %v211 = vmul.f32 %v195, %v209
    %v213 = vlaneseq
    %v214 = vshrl.u32 %v213, 7
    %v215 = vsub.s32 0, %v214
    %v216 = vrot.slane %v182, %v215
    %v218 = vmul.f32 %v210, %v216
    %v219 = vmul.f32 %v211, %v216
    %v221 = vlaneseq
    %v222 = vshrl.u32 %v221, 7
    %v223 = vsub.s32 0, %v222
    %v224 = vrot.slane %v183, %v223
    %v226 = vadd.f32 %v218, %v224
    %v227 = vadd.f32 %v219, %v224
    %v228 = vld [vmem:[%s6] sm:$0xff]
    %v229 = vld [vmem:[%s6 + $0x8] sm:$0xff]
    %v230 = vld [vmem:[%s6 + $0x10] sm:$0xff]
    %v231 = vld [vmem:[%s6 + $0x18] sm:$0xff]
    %v232 = vld [vmem:[%s7] sm:$0x1]
    %v234 = vlaneseq
    %v235 = vshrl.u32 %v234, 7
    %v236 = vsub.s32 0, %v235
    %v237 = vrot.slane %v232, %v236
    %v240 = vsel %vm184, %v226, 0
    %v243 = vsel %vm184, %v227, 0
    %245 = vmatprep.subr.mxu0 0.0
    %246 = vmatpush1.msra.mxu0 %v228
    %247 = vmatprep.subr.mxu0 0.0
    %248 = vmatpush1.msra.mxu0 %v229
    %249 = vmatprep.subr.mxu0 0.0
    %250 = vmatpush1.msra.mxu0 %v230
    %251 = vmatprep.subr.mxu0 0.0
    %252 = vmatpush1.msra.mxu0 %v231
    %253 = vmatprep.subr.mxu0 0.0
    %254 = vmatpush1.msra.mxu0 0.0
    %255 = vmatprep.subr.mxu0 0.0
    %256 = vmatpush1.msra.mxu0 0.0
    %257 = vmatprep.subr.mxu0 0.0
    %258 = vmatpush1.msra.mxu0 0.0
    %259 = vmatprep.subr.mxu0 0.0
    %260 = vmatpush1.msra.mxu0 0.0
    %261 = vmatprep.subr.mxu0 0.0
    %262 = vmatpush1.msra.mxu0 0.0
    %263 = vmatprep.subr.mxu0 0.0
    %264 = vmatpush1.msra.mxu0 0.0
    %265 = vmatprep.subr.mxu0 0.0
    %266 = vmatpush1.msra.mxu0 0.0
    %267 = vmatprep.subr.mxu0 0.0
    %268 = vmatpush1.msra.mxu0 0.0
    %269 = vmatprep.subr.mxu0 0.0
    %270 = vmatpush1.msra.mxu0 0.0
    %271 = vmatprep.subr.mxu0 0.0
    %272 = vmatpush1.msra.mxu0 0.0
    %273 = vmatprep.subr.mxu0 0.0
    %274 = vmatpush1.msra.mxu0 0.0
    %275 = vmatprep.subr.mxu0 0.0
    %276 = vmatpush1.msra.mxu0 0.0
    %277 = vmatprep.subr.mxu0 0.0
    %278 = vmatpush1.msra.mxu0 0.0
    %279 = vmatprep.subr.mxu0 0.0
    %280 = vmatpush1.msra.mxu0 0.0
    %281 = vmatprep.subr.mxu0 0.0
    %282 = vmatpush1.msra.mxu0 0.0
    %283 = vmatprep.subr.mxu0 0.0
    %284 = vmatpush1.msra.mxu0 0.0
    %285 = vmatprep.subr.mxu0 0.0
    %286 = vmatpush1.msra.mxu0 0.0
    %287 = vmatprep.subr.mxu0 0.0
    %288 = vmatpush1.msra.mxu0 0.0
    %289 = vmatprep.subr.mxu0 0.0
    %290 = vmatpush1.msra.mxu0 0.0
    %291 = vmatprep.subr.mxu0 0.0
    %292 = vmatpush1.msra.mxu0 0.0
    %293 = vmatprep.subr.mxu0 0.0
    %294 = vmatpush1.msra.mxu0 0.0
    %295 = vmatprep.subr.mxu0 0.0
    %296 = vmatpush1.msra.mxu0 0.0
    %297 = vmatprep.subr.mxu0 0.0
    %298 = vmatpush1.msra.mxu0 0.0
    %299 = vmatprep.subr.mxu0 0.0
    %300 = vmatpush1.msra.mxu0 0.0
    %301 = vmatprep.subr.mxu0 0.0
    %302 = vmatpush1.msra.mxu0 0.0
    %303 = vmatprep.subr.mxu0 0.0
    %304 = vmatpush1.msra.mxu0 0.0
    %305 = vmatprep.subr.mxu0 0.0
    %306 = vmatpush1.msra.mxu0 0.0
    %307 = vmatprep.subr.mxu0 0.0
    %308 = vmatpush1.msra.mxu0 0.0
    %309 = vmatprep.mubr.f32.mxu0 0.0
    %310 = vmatmul.mubr.f32.gmra.mrb[0].mxu0 %v240
    %v311 = vpop.f32.mrb[0].mxu0
    %v312 = vadd.f32 %v237, %v311
    %v313 = vpop.f32.mrb[0].mxu0
    %314 = vmatprep.mubr.f32.mxu0 0.0
    %315 = vmatmul.mubr.f32.gmra.mrb[0].mxu0 %v243
    %v316 = vpop.f32.mrb[0].mxu0
    %v317 = vadd.f32 %v237, %v316
    %v318 = vpop.f32.mrb[0].mxu0
    %319 = vdwg.mxu0
    %322 = vrot.lane.b32.xlu0 %v312, 96
    %v323 = vpop.permute.xlu0 %322
    %324 = vrot.lane.b32.xlu0 %v317, 96
    %v325 = vpop.permute.xlu0 %324
    %vm326 = vcmask 130048
    %v327 = vsel %vm326, %v312, 0
    %v329 = vsel %vm326, %v317, 0
    %v331 = vsel %vm326, %v323, 0
    %v333 = vsel %vm326, %v325, 0
    %335 = vmatprep.subr.mxu0 0.0
    %336 = vmatpush1.xpose.msra.mxu0 %v331
    %337 = vmatprep.subr.mxu0 0.0
    %338 = vmatpush1.xpose.msra.mxu0 %v333
    %339 = vmatprep.subr.mxu0 0.0
    %340 = vmatpush1.xpose.msra.mxu0 0.0
    %341 = vmatprep.subr.mxu0 0.0
    %342 = vmatpush1.xpose.msra.mxu0 0.0
    %343 = vmatprep.subr.mxu0 0.0
    %344 = vmatpush1.xpose.msra.mxu0 0.0
    %345 = vmatprep.subr.mxu0 0.0
    %346 = vmatpush1.xpose.msra.mxu0 0.0
    %347 = vmatprep.subr.mxu0 0.0
    %348 = vmatpush1.xpose.msra.mxu0 0.0
    %349 = vmatprep.subr.mxu0 0.0
    %350 = vmatpush1.xpose.msra.mxu0 0.0
    %351 = vmatprep.subr.mxu0 0.0
    %352 = vmatpush1.xpose.msra.mxu0 0.0
    %353 = vmatprep.subr.mxu0 0.0
    %354 = vmatpush1.xpose.msra.mxu0 0.0
    %355 = vmatprep.subr.mxu0 0.0
    %356 = vmatpush1.xpose.msra.mxu0 0.0
    %357 = vmatprep.subr.mxu0 0.0
    %358 = vmatpush1.xpose.msra.mxu0 0.0
    %359 = vmatprep.subr.mxu0 0.0
    %360 = vmatpush1.xpose.msra.mxu0 0.0
    %361 = vmatprep.subr.mxu0 0.0
    %362 = vmatpush1.xpose.msra.mxu0 0.0
    %363 = vmatprep.subr.mxu0 0.0
    %364 = vmatpush1.xpose.msra.mxu0 0.0
    %365 = vmatprep.subr.mxu0 0.0
    %366 = vmatpush1.xpose.msra.mxu0 0.0
    %367 = vmatprep.subr.mxu0 0.0
    %368 = vmatpush1.xpose.msra.mxu0 0.0
    %369 = vmatprep.subr.mxu0 0.0
    %370 = vmatpush1.xpose.msra.mxu0 0.0
    %371 = vmatprep.subr.mxu0 0.0
    %372 = vmatpush1.xpose.msra.mxu0 0.0
    %373 = vmatprep.subr.mxu0 0.0
    %374 = vmatpush1.xpose.msra.mxu0 0.0
    %375 = vmatprep.subr.mxu0 0.0
    %376 = vmatpush1.xpose.msra.mxu0 0.0
    %377 = vmatprep.subr.mxu0 0.0
    %378 = vmatpush1.xpose.msra.mxu0 0.0
    %379 = vmatprep.subr.mxu0 0.0
    %380 = vmatpush1.xpose.msra.mxu0 0.0
    %381 = vmatprep.subr.mxu0 0.0
    %382 = vmatpush1.xpose.msra.mxu0 0.0
    %383 = vmatprep.subr.mxu0 0.0
    %384 = vmatpush1.xpose.msra.mxu0 0.0
    %385 = vmatprep.subr.mxu0 0.0
    %386 = vmatpush1.xpose.msra.mxu0 0.0
    %387 = vmatprep.subr.mxu0 0.0
    %388 = vmatpush1.xpose.msra.mxu0 0.0
    %389 = vmatprep.subr.mxu0 0.0
    %390 = vmatpush1.xpose.msra.mxu0 0.0
    %391 = vmatprep.subr.mxu0 0.0
    %392 = vmatpush1.xpose.msra.mxu0 0.0
    %393 = vmatprep.subr.mxu0 0.0
    %394 = vmatpush1.xpose.msra.mxu0 0.0
    %395 = vmatprep.subr.mxu0 0.0
    %396 = vmatpush1.xpose.msra.mxu0 0.0
    %397 = vmatprep.subr.mxu0 0.0
    %398 = vmatpush1.xpose.msra.mxu0 0.0
    %399 = vmatprep.mubr.f32.mxu0 0.0
    %400 = vmatmul.mubr.f32.gmra.mrb[0].mxu0 %v327
    %v401 = vpop.f32.mrb[0].mxu0
    %v402 = vadd.f32 %v178, %v401
    %v403 = vpop.f32.mrb[0].mxu0
    %404 = vmatprep.mubr.f32.mxu0 0.0
    %405 = vmatmul.mubr.f32.gmra.mrb[0].mxu0 %v329
    %v406 = vpop.f32.mrb[0].mxu0
    %v407 = vadd.f32 %v179, %v406
    %v408 = vpop.f32.mrb[0].mxu0
    %409 = vdwg.mxu0
    %v410 = vsel %vm326, %v402, -inf
    %411 = vmax.xlane.f32.xlu0 %v410
    %v412 = vpop.xlane.xlu0 %411
    %v413 = vsel %vm326, %v407, -inf
    %414 = vmax.xlane.f32.xlu0 %v413
    %v415 = vpop.xlane.xlu0 %414
    %v416 = vsub.f32 %v402, %v412
    %v417 = vsub.f32 %v407, %v415
    %v418 = vmul.f32 %v416, 1.442695
    %v419 = vpow.pop %v418
    %v420 = vmul.f32 %v417, 1.442695
    %v421 = vpow.pop %v420
    %v422 = vsel %vm326, %v419, 0.0
    %423 = vadd.xlane.f32.xlu0 %v422
    %v424 = vpop.xlane.xlu0 %423
    %v425 = vsel %vm326, %v421, 0.0
    %426 = vadd.xlane.f32.xlu0 %v425
    %v427 = vpop.xlane.xlu0 %426
    %v428 = vrcp.pop %v424
    %v429 = vmul.f32 %v419, %v428
    %v430 = vrcp.pop %v427
    %v431 = vmul.f32 %v421, %v430
    %432 = vrot.lane.b32.xlu0 %v312, 64
    %v433 = vpop.permute.xlu0 %432
    %434 = vrot.lane.b32.xlu0 %v317, 64
    %v435 = vpop.permute.xlu0 %434
    %v439 = vsel %vm326, %v429, 0
    %v442 = vsel %vm326, %v431, 0
    %444 = vmatprep.subr.mxu0 0.0
    %445 = vmatpush1.msra.mxu0 %v433
    %446 = vmatprep.subr.mxu0 0.0
    %447 = vmatpush1.msra.mxu0 %v435
    %448 = vmatprep.subr.mxu0 0.0
    %449 = vmatpush1.msra.mxu0 0.0
    %450 = vmatprep.subr.mxu0 0.0
    %451 = vmatpush1.msra.mxu0 0.0
    %452 = vmatprep.subr.mxu0 0.0
    %453 = vmatpush1.msra.mxu0 0.0
    %454 = vmatprep.subr.mxu0 0.0
    %455 = vmatpush1.msra.mxu0 0.0
    %456 = vmatprep.subr.mxu0 0.0
    %457 = vmatpush1.msra.mxu0 0.0
    %458 = vmatprep.subr.mxu0 0.0
    %459 = vmatpush1.msra.mxu0 0.0
    %460 = vmatprep.subr.mxu0 0.0
    %461 = vmatpush1.msra.mxu0 0.0
    %462 = vmatprep.subr.mxu0 0.0
    %463 = vmatpush1.msra.mxu0 0.0
    %464 = vmatprep.subr.mxu0 0.0
    %465 = vmatpush1.msra.mxu0 0.0
    %466 = vmatprep.subr.mxu0 0.0
    %467 = vmatpush1.msra.mxu0 0.0
    %468 = vmatprep.subr.mxu0 0.0
    %469 = vmatpush1.msra.mxu0 0.0
    %470 = vmatprep.subr.mxu0 0.0
    %471 = vmatpush1.msra.mxu0 0.0
    %472 = vmatprep.subr.mxu0 0.0
    %473 = vmatpush1.msra.mxu0 0.0
    %474 = vmatprep.subr.mxu0 0.0
    %475 = vmatpush1.msra.mxu0 0.0
    %476 = vmatprep.subr.mxu0 0.0
    %477 = vmatpush1.msra.mxu0 0.0
    %478 = vmatprep.subr.mxu0 0.0
    %479 = vmatpush1.msra.mxu0 0.0
    %480 = vmatprep.subr.mxu0 0.0
    %481 = vmatpush1.msra.mxu0 0.0
    %482 = vmatprep.subr.mxu0 0.0
    %483 = vmatpush1.msra.mxu0 0.0
    %484 = vmatprep.subr.mxu0 0.0
    %485 = vmatpush1.msra.mxu0 0.0
    %486 = vmatprep.subr.mxu0 0.0
    %487 = vmatpush1.msra.mxu0 0.0
    %488 = vmatprep.subr.mxu0 0.0
    %489 = vmatpush1.msra.mxu0 0.0
    %490 = vmatprep.subr.mxu0 0.0
    %491 = vmatpush1.msra.mxu0 0.0
    %492 = vmatprep.subr.mxu0 0.0
    %493 = vmatpush1.msra.mxu0 0.0
    %494 = vmatprep.subr.mxu0 0.0
    %495 = vmatpush1.msra.mxu0 0.0
    %496 = vmatprep.subr.mxu0 0.0
    %497 = vmatpush1.msra.mxu0 0.0
    %498 = vmatprep.subr.mxu0 0.0
    %499 = vmatpush1.msra.mxu0 0.0
    %500 = vmatprep.subr.mxu0 0.0
    %501 = vmatpush1.msra.mxu0 0.0
    %502 = vmatprep.subr.mxu0 0.0
    %503 = vmatpush1.msra.mxu0 0.0
    %504 = vmatprep.subr.mxu0 0.0
    %505 = vmatpush1.msra.mxu0 0.0
    %506 = vmatprep.subr.mxu0 0.0
    %507 = vmatpush1.msra.mxu0 0.0
    %508 = vmatprep.mubr.f32.mxu0 0.0
    %509 = vmatmul.mubr.f32.gmra.mrb[0].mxu0 %v439
    %v510 = vpop.f32.mrb[0].mxu0
    %v511 = vadd.f32 0.0, %v510
    %v512 = vpop.f32.mrb[0].mxu0
    %513 = vmatprep.mubr.f32.mxu0 0.0
    %514 = vmatmul.mubr.f32.gmra.mrb[0].mxu0 %v442
    %v515 = vpop.f32.mrb[0].mxu0
    %v516 = vadd.f32 0.0, %v515
    %v517 = vpop.f32.mrb[0].mxu0
    %518 = vdwg.mxu0
    %519 = vrot.lane.b32.xlu0 %v312, 112
    %v520 = vpop.permute.xlu0 %519
    %521 = vrot.lane.b32.xlu0 %v317, 112
    %v522 = vpop.permute.xlu0 %521
    %523 = vrot.lane.b32.xlu0 %v312, 80
    %v524 = vpop.permute.xlu0 %523
    %525 = vrot.lane.b32.xlu0 %v317, 80
    %v526 = vpop.permute.xlu0 %525
    %v527 = vsel %vm326, %v520, 0
    %v529 = vsel %vm326, %v522, 0
    %v531 = vsel %vm326, %v524, 0
    %v533 = vsel %vm326, %v526, 0
    %535 = vmatprep.subr.mxu0 0.0
    %536 = vmatpush1.xpose.msra.mxu0 %v531
    %537 = vmatprep.subr.mxu0 0.0
    %538 = vmatpush1.xpose.msra.mxu0 %v533
    %539 = vmatprep.subr.mxu0 0.0
    %540 = vmatpush1.xpose.msra.mxu0 0.0
    %541 = vmatprep.subr.mxu0 0.0
    %542 = vmatpush1.xpose.msra.mxu0 0.0
    %543 = vmatprep.subr.mxu0 0.0
    %544 = vmatpush1.xpose.msra.mxu0 0.0
    %545 = vmatprep.subr.mxu0 0.0
    %546 = vmatpush1.xpose.msra.mxu0 0.0
    %547 = vmatprep.subr.mxu0 0.0
    %548 = vmatpush1.xpose.msra.mxu0 0.0
    %549 = vmatprep.subr.mxu0 0.0
    %550 = vmatpush1.xpose.msra.mxu0 0.0
    %551 = vmatprep.subr.mxu0 0.0
    %552 = vmatpush1.xpose.msra.mxu0 0.0
    %553 = vmatprep.subr.mxu0 0.0
    %554 = vmatpush1.xpose.msra.mxu0 0.0
    %555 = vmatprep.subr.mxu0 0.0
    %556 = vmatpush1.xpose.msra.mxu0 0.0
    %557 = vmatprep.subr.mxu0 0.0
    %558 = vmatpush1.xpose.msra.mxu0 0.0
    %559 = vmatprep.subr.mxu0 0.0
    %560 = vmatpush1.xpose.msra.mxu0 0.0
    %561 = vmatprep.subr.mxu0 0.0
    %562 = vmatpush1.xpose.msra.mxu0 0.0
    %563 = vmatprep.subr.mxu0 0.0
    %564 = vmatpush1.xpose.msra.mxu0 0.0
    %565 = vmatprep.subr.mxu0 0.0
    %566 = vmatpush1.xpose.msra.mxu0 0.0
    %567 = vmatprep.subr.mxu0 0.0
    %568 = vmatpush1.xpose.msra.mxu0 0.0
    %569 = vmatprep.subr.mxu0 0.0
    %570 = vmatpush1.xpose.msra.mxu0 0.0
    %571 = vmatprep.subr.mxu0 0.0
    %572 = vmatpush1.xpose.msra.mxu0 0.0
    %573 = vmatprep.subr.mxu0 0.0
    %574 = vmatpush1.xpose.msra.mxu0 0.0
    %575 = vmatprep.subr.mxu0 0.0
    %576 = vmatpush1.xpose.msra.mxu0 0.0
    %577 = vmatprep.subr.mxu0 0.0
    %578 = vmatpush1.xpose.msra.mxu0 0.0
    %579 = vmatprep.subr.mxu0 0.0
    %580 = vmatpush1.xpose.msra.mxu0 0.0
    %581 = vmatprep.subr.mxu0 0.0
    %582 = vmatpush1.xpose.msra.mxu0 0.0
    %583 = vmatprep.subr.mxu0 0.0
    %584 = vmatpush1.xpose.msra.mxu0 0.0
    %585 = vmatprep.subr.mxu0 0.0
    %586 = vmatpush1.xpose.msra.mxu0 0.0
    %587 = vmatprep.subr.mxu0 0.0
    %588 = vmatpush1.xpose.msra.mxu0 0.0
    %589 = vmatprep.subr.mxu0 0.0
    %590 = vmatpush1.xpose.msra.mxu0 0.0
    %591 = vmatprep.subr.mxu0 0.0
    %592 = vmatpush1.xpose.msra.mxu0 0.0
    %593 = vmatprep.subr.mxu0 0.0
    %594 = vmatpush1.xpose.msra.mxu0 0.0
    %595 = vmatprep.subr.mxu0 0.0
    %596 = vmatpush1.xpose.msra.mxu0 0.0
    %597 = vmatprep.subr.mxu0 0.0
    %598 = vmatpush1.xpose.msra.mxu0 0.0
    %599 = vmatprep.mubr.f32.mxu0 0.0
    %600 = vmatmul.mubr.f32.gmra.mrb[0].mxu0 %v527
    %v601 = vpop.f32.mrb[0].mxu0
    %v602 = vadd.f32 %v178, %v601
    %v603 = vpop.f32.mrb[0].mxu0
    %604 = vmatprep.mubr.f32.mxu0 0.0
    %605 = vmatmul.mubr.f32.gmra.mrb[0].mxu0 %v529
    %v606 = vpop.f32.mrb[0].mxu0
    %v607 = vadd.f32 %v179, %v606
    %v608 = vpop.f32.mrb[0].mxu0
    %609 = vdwg.mxu0
    %v610 = vsel %vm326, %v602, -inf
    %611 = vmax.xlane.f32.xlu0 %v610
    %v612 = vpop.xlane.xlu0 %611
    %v613 = vsel %vm326, %v607, -inf
    %614 = vmax.xlane.f32.xlu0 %v613
    %v615 = vpop.xlane.xlu0 %614
    %v616 = vsub.f32 %v602, %v612
    %v617 = vsub.f32 %v607, %v615
    %v618 = vmul.f32 %v616, 1.442695
    %v619 = vpow.pop %v618
    %v620 = vmul.f32 %v617, 1.442695
    %v621 = vpow.pop %v620
    %v622 = vsel %vm326, %v619, 0.0
    %623 = vadd.xlane.f32.xlu0 %v622
    %v624 = vpop.xlane.xlu0 %623
    %v625 = vsel %vm326, %v621, 0.0
    %626 = vadd.xlane.f32.xlu0 %v625
    %v627 = vpop.xlane.xlu0 %626
    %v628 = vrcp.pop %v624
    %v629 = vmul.f32 %v619, %v628
    %v630 = vrcp.pop %v627
    %v631 = vmul.f32 %v621, %v630
    %632 = vrot.lane.b32.xlu0 %v312, 48
    %v633 = vpop.permute.xlu0 %632
    %634 = vrot.lane.b32.xlu0 %v317, 48
    %v635 = vpop.permute.xlu0 %634
    %v639 = vsel %vm326, %v629, 0
    %v642 = vsel %vm326, %v631, 0
    %644 = vmatprep.subr.mxu0 0.0
    %645 = vmatpush1.msra.mxu0 %v633
    %646 = vmatprep.subr.mxu0 0.0
    %647 = vmatpush1.msra.mxu0 %v635
    %648 = vmatprep.subr.mxu0 0.0
    %649 = vmatpush1.msra.mxu0 0.0
    %650 = vmatprep.subr.mxu0 0.0
    %651 = vmatpush1.msra.mxu0 0.0
    %652 = vmatprep.subr.mxu0 0.0
    %653 = vmatpush1.msra.mxu0 0.0
    %654 = vmatprep.subr.mxu0 0.0
    %655 = vmatpush1.msra.mxu0 0.0
    %656 = vmatprep.subr.mxu0 0.0
    %657 = vmatpush1.msra.mxu0 0.0
    %658 = vmatprep.subr.mxu0 0.0
    %659 = vmatpush1.msra.mxu0 0.0
    %660 = vmatprep.subr.mxu0 0.0
    %661 = vmatpush1.msra.mxu0 0.0
    %662 = vmatprep.subr.mxu0 0.0
    %663 = vmatpush1.msra.mxu0 0.0
    %664 = vmatprep.subr.mxu0 0.0
    %665 = vmatpush1.msra.mxu0 0.0
    %666 = vmatprep.subr.mxu0 0.0
    %667 = vmatpush1.msra.mxu0 0.0
    %668 = vmatprep.subr.mxu0 0.0
    %669 = vmatpush1.msra.mxu0 0.0
    %670 = vmatprep.subr.mxu0 0.0
    %671 = vmatpush1.msra.mxu0 0.0
    %672 = vmatprep.subr.mxu0 0.0
    %673 = vmatpush1.msra.mxu0 0.0
    %674 = vmatprep.subr.mxu0 0.0
    %675 = vmatpush1.msra.mxu0 0.0
    %676 = vmatprep.subr.mxu0 0.0
    %677 = vmatpush1.msra.mxu0 0.0
    %678 = vmatprep.subr.mxu0 0.0
    %679 = vmatpush1.msra.mxu0 0.0
    %680 = vmatprep.subr.mxu0 0.0
    %681 = vmatpush1.msra.mxu0 0.0
    %682 = vmatprep.subr.mxu0 0.0
    %683 = vmatpush1.msra.mxu0 0.0
    %684 = vmatprep.subr.mxu0 0.0
    %685 = vmatpush1.msra.mxu0 0.0
    %686 = vmatprep.subr.mxu0 0.0
    %687 = vmatpush1.msra.mxu0 0.0
    %688 = vmatprep.subr.mxu0 0.0
    %689 = vmatpush1.msra.mxu0 0.0
    %690 = vmatprep.subr.mxu0 0.0
    %691 = vmatpush1.msra.mxu0 0.0
    %692 = vmatprep.subr.mxu0 0.0
    %693 = vmatpush1.msra.mxu0 0.0
    %694 = vmatprep.subr.mxu0 0.0
    %695 = vmatpush1.msra.mxu0 0.0
    %696 = vmatprep.subr.mxu0 0.0
    %697 = vmatpush1.msra.mxu0 0.0
    %698 = vmatprep.subr.mxu0 0.0
    %699 = vmatpush1.msra.mxu0 0.0
    %700 = vmatprep.subr.mxu0 0.0
    %701 = vmatpush1.msra.mxu0 0.0
    %702 = vmatprep.subr.mxu0 0.0
    %703 = vmatpush1.msra.mxu0 0.0
    %704 = vmatprep.subr.mxu0 0.0
    %705 = vmatpush1.msra.mxu0 0.0
    %706 = vmatprep.subr.mxu0 0.0
    %707 = vmatpush1.msra.mxu0 0.0
    %708 = vmatprep.mubr.f32.mxu0 0.0
    %709 = vmatmul.mubr.f32.gmra.mrb[0].mxu0 %v639
    %v710 = vpop.f32.mrb[0].mxu0
    %v711 = vadd.f32 0.0, %v710
    %v712 = vpop.f32.mrb[0].mxu0
    %713 = vmatprep.mubr.f32.mxu0 0.0
    %714 = vmatmul.mubr.f32.gmra.mrb[0].mxu0 %v642
    %v715 = vpop.f32.mrb[0].mxu0
    %v716 = vadd.f32 0.0, %v715
    %v717 = vpop.f32.mrb[0].mxu0
    %718 = vdwg.mxu0
    %721 = vrot.lane.b32.xlu0 %v711, 16
    %v722 = vpop.permute.xlu0 %721
    %723 = vrot.lane.b32.xlu0 %v716, 16
    %v724 = vpop.permute.xlu0 %723
    %v727 = vsel %vm326, %v511, %v722
    %v728 = vsel %vm326, %v516, %v724
    %v729 = vld [vmem:[%s8] sm:$0xff]
    %v730 = vld [vmem:[%s8 + $0x8] sm:$0xff]
    %v731 = vld [vmem:[%s8 + $0x10] sm:$0xff]
    %v732 = vld [vmem:[%s8 + $0x18] sm:$0xff]
    %v733 = vld [vmem:[%s9] sm:$0x1]
    %v735 = vlaneseq
    %v736 = vshrl.u32 %v735, 7
    %v737 = vsub.s32 0, %v736
    %v738 = vrot.slane %v733, %v737
    %v741 = vsel %vm184, %v727, 0
    %v744 = vsel %vm184, %v728, 0
    %746 = vmatprep.subr.mxu0 0.0
    %747 = vmatpush1.msra.mxu0 %v729
    %748 = vmatprep.subr.mxu0 0.0
    %749 = vmatpush1.msra.mxu0 %v730
    %750 = vmatprep.subr.mxu0 0.0
    %751 = vmatpush1.msra.mxu0 %v731
    %752 = vmatprep.subr.mxu0 0.0
    %753 = vmatpush1.msra.mxu0 %v732
    %754 = vmatprep.subr.mxu0 0.0
    %755 = vmatpush1.msra.mxu0 0.0
    %756 = vmatprep.subr.mxu0 0.0
    %757 = vmatpush1.msra.mxu0 0.0
    %758 = vmatprep.subr.mxu0 0.0
    %759 = vmatpush1.msra.mxu0 0.0
    %760 = vmatprep.subr.mxu0 0.0
    %761 = vmatpush1.msra.mxu0 0.0
    %762 = vmatprep.subr.mxu0 0.0
    %763 = vmatpush1.msra.mxu0 0.0
    %764 = vmatprep.subr.mxu0 0.0
    %765 = vmatpush1.msra.mxu0 0.0
    %766 = vmatprep.subr.mxu0 0.0
    %767 = vmatpush1.msra.mxu0 0.0
    %768 = vmatprep.subr.mxu0 0.0
    %769 = vmatpush1.msra.mxu0 0.0
    %770 = vmatprep.subr.mxu0 0.0
    %771 = vmatpush1.msra.mxu0 0.0
    %772 = vmatprep.subr.mxu0 0.0
    %773 = vmatpush1.msra.mxu0 0.0
    %774 = vmatprep.subr.mxu0 0.0
    %775 = vmatpush1.msra.mxu0 0.0
    %776 = vmatprep.subr.mxu0 0.0
    %777 = vmatpush1.msra.mxu0 0.0
    %778 = vmatprep.subr.mxu0 0.0
    %779 = vmatpush1.msra.mxu0 0.0
    %780 = vmatprep.subr.mxu0 0.0
    %781 = vmatpush1.msra.mxu0 0.0
    %782 = vmatprep.subr.mxu0 0.0
    %783 = vmatpush1.msra.mxu0 0.0
    %784 = vmatprep.subr.mxu0 0.0
    %785 = vmatpush1.msra.mxu0 0.0
    %786 = vmatprep.subr.mxu0 0.0
    %787 = vmatpush1.msra.mxu0 0.0
    %788 = vmatprep.subr.mxu0 0.0
    %789 = vmatpush1.msra.mxu0 0.0
    %790 = vmatprep.subr.mxu0 0.0
    %791 = vmatpush1.msra.mxu0 0.0
    %792 = vmatprep.subr.mxu0 0.0
    %793 = vmatpush1.msra.mxu0 0.0
    %794 = vmatprep.subr.mxu0 0.0
    %795 = vmatpush1.msra.mxu0 0.0
    %796 = vmatprep.subr.mxu0 0.0
    %797 = vmatpush1.msra.mxu0 0.0
    %798 = vmatprep.subr.mxu0 0.0
    %799 = vmatpush1.msra.mxu0 0.0
    %800 = vmatprep.subr.mxu0 0.0
    %801 = vmatpush1.msra.mxu0 0.0
    %802 = vmatprep.subr.mxu0 0.0
    %803 = vmatpush1.msra.mxu0 0.0
    %804 = vmatprep.subr.mxu0 0.0
    %805 = vmatpush1.msra.mxu0 0.0
    %806 = vmatprep.subr.mxu0 0.0
    %807 = vmatpush1.msra.mxu0 0.0
    %808 = vmatprep.subr.mxu0 0.0
    %809 = vmatpush1.msra.mxu0 0.0
    %810 = vmatprep.mubr.f32.mxu0 0.0
    %811 = vmatmul.mubr.f32.gmra.mrb[0].mxu0 %v741
    %v812 = vpop.f32.mrb[0].mxu0
    %v813 = vadd.f32 %v738, %v812
    %v814 = vpop.f32.mrb[0].mxu0
    %815 = vmatprep.mubr.f32.mxu0 0.0
    %816 = vmatmul.mubr.f32.gmra.mrb[0].mxu0 %v744
    %v817 = vpop.f32.mrb[0].mxu0
    %v818 = vadd.f32 %v738, %v817
    %v819 = vpop.f32.mrb[0].mxu0
    %820 = vdwg.mxu0
    %v821 = vadd.f32 %v226, %v813
    %v822 = vadd.f32 %v227, %v818
    %v823 = vld [vmem:[%s10] sm:$0x1]
    %v824 = vld [vmem:[#allocation11] sm:$0x1]
    %v825 = vsel %vm184, %v821, 0.0
    %826 = vadd.xlane.f32.xlu0 %v825
    %v827 = vpop.xlane.xlu0 %826
    %v828 = vsel %vm184, %v822, 0.0
    %829 = vadd.xlane.f32.xlu0 %v828
    %v830 = vpop.xlane.xlu0 %829
    %v831 = vmul.f32 %v827, %v191
    %v832 = vmul.f32 %v830, %v191
    %v833 = vsub.f32 %v821, %v831
    %v834 = vsub.f32 %v822, %v832
    %v835 = vmul.f32 %v833, %v833
    %v836 = vmul.f32 %v834, %v834
    %v837 = vsel %vm184, %v835, 0.0
    %838 = vadd.xlane.f32.xlu0 %v837
    %v839 = vpop.xlane.xlu0 %838
    %v840 = vsel %vm184, %v836, 0.0
    %841 = vadd.xlane.f32.xlu0 %v840
    %v842 = vpop.xlane.xlu0 %841
    %v843 = vmul.f32 %v839, %v191
    %v844 = vmul.f32 %v842, %v191
    %v845 = vadd.f32 %v843, 1e-12
    %v846 = vadd.f32 %v844, 1e-12
    %v847 = vrsqrt.pop %v845
    %v848 = vrsqrt.pop %v846
    %v849 = vmul.f32 %v833, %v847
    %v850 = vmul.f32 %v834, %v848
    %v852 = vlaneseq
    %v853 = vshrl.u32 %v852, 7
    %v854 = vsub.s32 0, %v853
    %v855 = vrot.slane %v823, %v854
    %v857 = vmul.f32 %v849, %v855
    %v858 = vmul.f32 %v850, %v855
    %v860 = vlaneseq
    %v861 = vshrl.u32 %v860, 7
    %v862 = vsub.s32 0, %v861
    %v863 = vrot.slane %v824, %v862
    %v865 = vadd.f32 %v857, %v863
    %v866 = vadd.f32 %v858, %v863
    %v867 = vld [vmem:[%s12] sm:$0xff]
    %v868 = vld [vmem:[%s12 + $0x8] sm:$0xff]
    %v869 = vld [vmem:[%s12 + $0x10] sm:$0xff]
    %v870 = vld [vmem:[%s12 + $0x18] sm:$0xff]
    %v871 = vld [vmem:[#allocation13] sm:$0x1]
    %v873 = vlaneseq
    %v874 = vshrl.u32 %v873, 7
    %v875 = vsub.s32 0, %v874
    %v876 = vrot.slane %v871, %v875
    %v879 = vsel %vm184, %v865, 0
    %v882 = vsel %vm184, %v866, 0
    %884 = vmatprep.subr.mxu0 0.0
    %885 = vmatpush1.msra.mxu0 %v867
    %886 = vmatprep.subr.mxu0 0.0
    %887 = vmatpush1.msra.mxu0 %v868
    %888 = vmatprep.subr.mxu0 0.0
    %889 = vmatpush1.msra.mxu0 %v869
    %890 = vmatprep.subr.mxu0 0.0
    %891 = vmatpush1.msra.mxu0 %v870
    %892 = vmatprep.subr.mxu0 0.0
    %893 = vmatpush1.msra.mxu0 0.0
    %894 = vmatprep.subr.mxu0 0.0
    %895 = vmatpush1.msra.mxu0 0.0
    %896 = vmatprep.subr.mxu0 0.0
    %897 = vmatpush1.msra.mxu0 0.0
    %898 = vmatprep.subr.mxu0 0.0
    %899 = vmatpush1.msra.mxu0 0.0
    %900 = vmatprep.subr.mxu0 0.0
    %901 = vmatpush1.msra.mxu0 0.0
    %902 = vmatprep.subr.mxu0 0.0
    %903 = vmatpush1.msra.mxu0 0.0
    %904 = vmatprep.subr.mxu0 0.0
    %905 = vmatpush1.msra.mxu0 0.0
    %906 = vmatprep.subr.mxu0 0.0
    %907 = vmatpush1.msra.mxu0 0.0
    %908 = vmatprep.subr.mxu0 0.0
    %909 = vmatpush1.msra.mxu0 0.0
    %910 = vmatprep.subr.mxu0 0.0
    %911 = vmatpush1.msra.mxu0 0.0
    %912 = vmatprep.subr.mxu0 0.0
    %913 = vmatpush1.msra.mxu0 0.0
    %914 = vmatprep.subr.mxu0 0.0
    %915 = vmatpush1.msra.mxu0 0.0
    %916 = vmatprep.subr.mxu0 0.0
    %917 = vmatpush1.msra.mxu0 0.0
    %918 = vmatprep.subr.mxu0 0.0
    %919 = vmatpush1.msra.mxu0 0.0
    %920 = vmatprep.subr.mxu0 0.0
    %921 = vmatpush1.msra.mxu0 0.0
    %922 = vmatprep.subr.mxu0 0.0
    %923 = vmatpush1.msra.mxu0 0.0
    %924 = vmatprep.subr.mxu0 0.0
    %925 = vmatpush1.msra.mxu0 0.0
    %926 = vmatprep.subr.mxu0 0.0
    %927 = vmatpush1.msra.mxu0 0.0
    %928 = vmatprep.subr.mxu0 0.0
    %929 = vmatpush1.msra.mxu0 0.0
    %930 = vmatprep.subr.mxu0 0.0
    %931 = vmatpush1.msra.mxu0 0.0
    %932 = vmatprep.subr.mxu0 0.0
    %933 = vmatpush1.msra.mxu0 0.0
    %934 = vmatprep.subr.mxu0 0.0
    %935 = vmatpush1.msra.mxu0 0.0
    %936 = vmatprep.subr.mxu0 0.0
    %937 = vmatpush1.msra.mxu0 0.0
    %938 = vmatprep.subr.mxu0 0.0
    %939 = vmatpush1.msra.mxu0 0.0
    %940 = vmatprep.subr.mxu0 0.0
    %941 = vmatpush1.msra.mxu0 0.0
    %942 = vmatprep.subr.mxu0 0.0
    %943 = vmatpush1.msra.mxu0 0.0
    %944 = vmatprep.subr.mxu0 0.0
    %945 = vmatpush1.msra.mxu0 0.0
    %946 = vmatprep.subr.mxu0 0.0
    %947 = vmatpush1.msra.mxu0 0.0
    %948 = vmatprep.mubr.f32.mxu0 0.0
    %949 = vmatmul.mubr.f32.gmra.mrb[0].mxu0 %v879
    %v950 = vpop.f32.mrb[0].mxu0
    %v951 = vadd.f32 %v876, %v950
    %v952 = vpop.f32.mrb[0].mxu0
    %953 = vmatprep.mubr.f32.mxu0 0.0
    %954 = vmatmul.mubr.f32.gmra.mrb[0].mxu0 %v882
    %v955 = vpop.f32.mrb[0].mxu0
    %v956 = vadd.f32 %v876, %v955
    %v957 = vpop.f32.mrb[0].mxu0
    %958 = vdwg.mxu0
    %v959 = vmul.f32 %v951, %v951
    %v960 = vmul.f32 %v956, %v956
    %v961 = vmul.f32 %v951, %v959
    %v962 = vmul.f32 %v956, %v960
    %v963 = vmul.f32 %v961, 0.044715
    %v964 = vmul.f32 %v962, 0.044715
    %v965 = vadd.f32 %v951, %v963
    %v966 = vadd.f32 %v956, %v964
    %v967 = vmul.f32 %v965, 0.7978846
    %v968 = vmul.f32 %v966, 0.7978846
    %v969 = vtanh.pop %v967
    %v970 = vtanh.pop %v968
    %v971 = vadd.f32 %v969, 1.0
    %v972 = vadd.f32 %v970, 1.0
    %v973 = vmul.f32 %v971, 0.5
    %v974 = vmul.f32 %v972, 0.5
    %v975 = vmul.f32 %v951, %v973
    %v976 = vmul.f32 %v956, %v974
    %v977 = vld [vmem:[%s14] sm:$0xff]
    %v978 = vld [vmem:[%s14 + $0x8] sm:$0xff]
    %v979 = vld [vmem:[%s14 + $0x10] sm:$0xff]
    %v980 = vld [vmem:[%s14 + $0x18] sm:$0xff]
    %v981 = vld [vmem:[%s14 + $0x20] sm:$0xff]
    %v982 = vld [vmem:[%s14 + $0x28] sm:$0xff]
    %v983 = vld [vmem:[%s14 + $0x30] sm:$0xff]
    %v984 = vld [vmem:[%s14 + $0x38] sm:$0xff]
    %v985 = vld [vmem:[%s15] sm:$0x1]
    %v987 = vlaneseq
    %v988 = vshrl.u32 %v987, 7
    %v989 = vsub.s32 0, %v988
    %v990 = vrot.slane %v985, %v989
    %vm992 = vcmask 523264
    %v994 = vsel %vm992, %v975, 0
    %v997 = vsel %vm992, %v976, 0
    %999 = vmatprep.subr.mxu0 0.0
    %1000 = vmatpush1.msra.mxu0 %v977
    %1001 = vmatprep.subr.mxu0 0.0
    %1002 = vmatpush1.msra.mxu0 %v978
    %1003 = vmatprep.subr.mxu0 0.0
    %1004 = vmatpush1.msra.mxu0 %v979
    %1005 = vmatprep.subr.mxu0 0.0
    %1006 = vmatpush1.msra.mxu0 %v980
    %1007 = vmatprep.subr.mxu0 0.0
    %1008 = vmatpush1.msra.mxu0 %v981
    %1009 = vmatprep.subr.mxu0 0.0
    %1010 = vmatpush1.msra.mxu0 %v982
    %1011 = vmatprep.subr.mxu0 0.0
    %1012 = vmatpush1.msra.mxu0 %v983
    %1013 = vmatprep.subr.mxu0 0.0
    %1014 = vmatpush1.msra.mxu0 %v984
    %1015 = vmatprep.subr.mxu0 0.0
    %1016 = vmatpush1.msra.mxu0 0.0
    %1017 = vmatprep.subr.mxu0 0.0
    %1018 = vmatpush1.msra.mxu0 0.0
    %1019 = vmatprep.subr.mxu0 0.0
    %1020 = vmatpush1.msra.mxu0 0.0
    %1021 = vmatprep.subr.mxu0 0.0
    %1022 = vmatpush1.msra.mxu0 0.0
    %1023 = vmatprep.subr.mxu0 0.0
    %1024 = vmatpush1.msra.mxu0 0.0
    %1025 = vmatprep.subr.mxu0 0.0
    %1026 = vmatpush1.msra.mxu0 0.0
    %1027 = vmatprep.subr.mxu0 0.0
    %1028 = vmatpush1.msra.mxu0 0.0
    %1029 = vmatprep.subr.mxu0 0.0
    %1030 = vmatpush1.msra.mxu0 0.0
    %1031 = vmatprep.subr.mxu0 0.0
    %1032 = vmatpush1.msra.mxu0 0.0
    %1033 = vmatprep.subr.mxu0 0.0
    %1034 = vmatpush1.msra.mxu0 0.0
    %1035 = vmatprep.subr.mxu0 0.0
    %1036 = vmatpush1.msra.mxu0 0.0
    %1037 = vmatprep.subr.mxu0 0.0
    %1038 = vmatpush1.msra.mxu0 0.0
    %1039 = vmatprep.subr.mxu0 0.0
    %1040 = vmatpush1.msra.mxu0 0.0
    %1041 = vmatprep.subr.mxu0 0.0
    %1042 = vmatpush1.msra.mxu0 0.0
    %1043 = vmatprep.subr.mxu0 0.0
    %1044 = vmatpush1.msra.mxu0 0.0
    %1045 = vmatprep.subr.mxu0 0.0
    %1046 = vmatpush1.msra.mxu0 0.0
    %1047 = vmatprep.subr.mxu0 0.0
    %1048 = vmatpush1.msra.mxu0 0.0
    %1049 = vmatprep.subr.mxu0 0.0
    %1050 = vmatpush1.msra.mxu0 0.0
    %1051 = vmatprep.subr.mxu0 0.0
    %1052 = vmatpush1.msra.mxu0 0.0
    %1053 = vmatprep.subr.mxu0 0.0
    %1054 = vmatpush1.msra.mxu0 0.0
    %1055 = vmatprep.subr.mxu0 0.0
    %1056 = vmatpush1.msra.mxu0 0.0
    %1057 = vmatprep.subr.mxu0 0.0
    %1058 = vmatpush1.msra.mxu0 0.0
    %1059 = vmatprep.subr.mxu0 0.0
    %1060 = vmatpush1.msra.mxu0 0.0
    %1061 = vmatprep.subr.mxu0 0.0
    %1062 = vmatpush1.msra.mxu0 0.0
    %1063 = vmatprep.mubr.f32.mxu0 0.0
    %1064 = vmatmul.mubr.f32.gmra.mrb[0].mxu0 %v994
    %v1065 = vpop.f32.mrb[0].mxu0
    %v1066 = vadd.f32 %v990, %v1065
    %v1067 = vpop.f32.mrb[0].mxu0
    %1068 = vmatprep.mubr.f32.mxu0 0.0
    %1069 = vmatmul.mubr.f32.gmra.mrb[0].mxu0 %v997
    %v1070 = vpop.f32.mrb[0].mxu0
    %v1071 = vadd.f32 %v990, %v1070
    %v1072 = vpop.f32.mrb[0].mxu0
    %1073 = vdwg.mxu0
    %v1074 = vadd.f32 %v865, %v1066
    %v1075 = vadd.f32 %v866, %v1071
    %v1076 = vld [vmem:[%s16] sm:$0x1]
    %v1077 = vld [vmem:[%s17] sm:$0x1]
    %v1078 = vsel %vm184, %v1074, 0.0
    %1079 = vadd.xlane.f32.xlu0 %v1078
    %v1080 = vpop.xlane.xlu0 %1079
    %v1081 = vsel %vm184, %v1075, 0.0
    %1082 = vadd.xlane.f32.xlu0 %v1081
    %v1083 = vpop.xlane.xlu0 %1082
    %v1084 = vmul.f32 %v1080, %v191
    %v1085 = vmul.f32 %v1083, %v191
    %v1086 = vsub.f32 %v1074, %v1084
    %v1087 = vsub.f32 %v1075, %v1085
    %v1088 = vmul.f32 %v1086, %v1086
    %v1089 = vmul.f32 %v1087, %v1087
    %v1090 = vsel %vm184, %v1088, 0.0
    %1091 = vadd.xlane.f32.xlu0 %v1090
    %v1092 = vpop.xlane.xlu0 %1091
    %v1093 = vsel %vm184, %v1089, 0.0
    %1094 = vadd.xlane.f32.xlu0 %v1093
    %v1095 = vpop.xlane.xlu0 %1094
    %v1096 = vmul.f32 %v1092, %v191
    %v1097 = vmul.f32 %v1095, %v191
    %v1098 = vadd.f32 %v1096, 1e-12
    %v1099 = vadd.f32 %v1097, 1e-12
    %v1100 = vrsqrt.pop %v1098
    %v1101 = vrsqrt.pop %v1099
    %v1102 = vmul.f32 %v1086, %v1100
    %v1103 = vmul.f32 %v1087, %v1101
    %v1105 = vlaneseq
    %v1106 = vshrl.u32 %v1105, 7
    %v1107 = vsub.s32 0, %v1106
    %v1108 = vrot.slane %v1076, %v1107
    %v1110 = vmul.f32 %v1102, %v1108
    %v1111 = vmul.f32 %v1103, %v1108
    %v1113 = vlaneseq
    %v1114 = vshrl.u32 %v1113, 7
    %v1115 = vsub.s32 0, %v1114
    %v1116 = vrot.slane %v1077, %v1115
    %v1118 = vadd.f32 %v1110, %v1116
    %v1119 = vadd.f32 %v1111, %v1116
    %v1120 = vadd.f32 %v226, %v1118
    %v1121 = vadd.f32 %v227, %v1119
    %s1122 = scalar_lea.vmem %s6, 32
    %v1123 = vld [vmem:[%s1122] sm:$0xff]
    %v1124 = vld [vmem:[%s1122 + $0x8] sm:$0xff]
    %v1125 = vld [vmem:[%s1122 + $0x10] sm:$0xff]
    %v1126 = vld [vmem:[%s1122 + $0x18] sm:$0xff]
    %s1127 = scalar_lea.vmem %s7, 1
    %v1128 = vld [vmem:[%s1127] sm:$0x1]
    %v1130 = vlaneseq
    %v1131 = vshrl.u32 %v1130, 7
    %v1132 = vsub.s32 0, %v1131
    %v1133 = vrot.slane %v1128, %v1132
    %v1136 = vsel %vm184, %v1118, 0
    %v1139 = vsel %vm184, %v1119, 0
    %1141 = vmatprep.subr.mxu0 0.0
    %1142 = vmatpush1.msra.mxu0 %v1123
    %1143 = vmatprep.subr.mxu0 0.0
    %1144 = vmatpush1.msra.mxu0 %v1124
    %1145 = vmatprep.subr.mxu0 0.0
    %1146 = vmatpush1.msra.mxu0 %v1125
    %1147 = vmatprep.subr.mxu0 0.0
    %1148 = vmatpush1.msra.mxu0 %v1126
    %1149 = vmatprep.subr.mxu0 0.0
    %1150 = vmatpush1.msra.mxu0 0.0
    %1151 = vmatprep.subr.mxu0 0.0
    %1152 = vmatpush1.msra.mxu0 0.0
    %1153 = vmatprep.subr.mxu0 0.0
    %1154 = vmatpush1.msra.mxu0 0.0
    %1155 = vmatprep.subr.mxu0 0.0
    %1156 = vmatpush1.msra.mxu0 0.0
    %1157 = vmatprep.subr.mxu0 0.0
    %1158 = vmatpush1.msra.mxu0 0.0
    %1159 = vmatprep.subr.mxu0 0.0
    %1160 = vmatpush1.msra.mxu0 0.0
    %1161 = vmatprep.subr.mxu0 0.0
    %1162 = vmatpush1.msra.mxu0 0.0
    %1163 = vmatprep.subr.mxu0 0.0
    %1164 = vmatpush1.msra.mxu0 0.0
    %1165 = vmatprep.subr.mxu0 0.0
    %1166 = vmatpush1.msra.mxu0 0.0
    %1167 = vmatprep.subr.mxu0 0.0
    %1168 = vmatpush1.msra.mxu0 0.0
    %1169 = vmatprep.subr.mxu0 0.0
    %1170 = vmatpush1.msra.mxu0 0.0
    %1171 = vmatprep.subr.mxu0 0.0
    %1172 = vmatpush1.msra.mxu0 0.0
    %1173 = vmatprep.subr.mxu0 0.0
    %1174 = vmatpush1.msra.mxu0 0.0
    %1175 = vmatprep.subr.mxu0 0.0
    %1176 = vmatpush1.msra.mxu0 0.0
    %1177 = vmatprep.subr.mxu0 0.0
    %1178 = vmatpush1.msra.mxu0 0.0
    %1179 = vmatprep.subr.mxu0 0.0
    %1180 = vmatpush1.msra.mxu0 0.0
    %1181 = vmatprep.subr.mxu0 0.0
    %1182 = vmatpush1.msra.mxu0 0.0
    %1183 = vmatprep.subr.mxu0 0.0
    %1184 = vmatpush1.msra.mxu0 0.0
    %1185 = vmatprep.subr.mxu0 0.0
    %1186 = vmatpush1.msra.mxu0 0.0
    %1187 = vmatprep.subr.mxu0 0.0
    %1188 = vmatpush1.msra.mxu0 0.0
    %1189 = vmatprep.subr.mxu0 0.0
    %1190 = vmatpush1.msra.mxu0 0.0
    %1191 = vmatprep.subr.mxu0 0.0
    %1192 = vmatpush1.msra.mxu0 0.0
    %1193 = vmatprep.subr.mxu0 0.0
    %1194 = vmatpush1.msra.mxu0 0.0
    %1195 = vmatprep.subr.mxu0 0.0
    %1196 = vmatpush1.msra.mxu0 0.0
    %1197 = vmatprep.subr.mxu0 0.0
    %1198 = vmatpush1.msra.mxu0 0.0
    %1199 = vmatprep.subr.mxu0 0.0
    %1200 = vmatpush1.msra.mxu0 0.0
    %1201 = vmatprep.subr.mxu0 0.0
    %1202 = vmatpush1.msra.mxu0 0.0
    %1203 = vmatprep.subr.mxu0 0.0
    %1204 = vmatpush1.msra.mxu0 0.0
    %1205 = vmatprep.mubr.f32.mxu0 0.0
    %1206 = vmatmul.mubr.f32.gmra.mrb[0].mxu0 %v1136
    %v1207 = vpop.f32.mrb[0].mxu0
    %v1208 = vadd.f32 %v1133, %v1207
    %v1209 = vpop.f32.mrb[0].mxu0
    %1210 = vmatprep.mubr.f32.mxu0 0.0
    %1211 = vmatmul.mubr.f32.gmra.mrb[0].mxu0 %v1139
    %v1212 = vpop.f32.mrb[0].mxu0
    %v1213 = vadd.f32 %v1133, %v1212
    %v1214 = vpop.f32.mrb[0].mxu0
    %1215 = vdwg.mxu0
    %1218 = vrot.lane.b32.xlu0 %v1208, 96
    %v1219 = vpop.permute.xlu0 %1218
    %1220 = vrot.lane.b32.xlu0 %v1213, 96
    %v1221 = vpop.permute.xlu0 %1220
    %v1222 = vsel %vm326, %v1208, 0
    %v1224 = vsel %vm326, %v1213, 0
    %v1226 = vsel %vm326, %v1219, 0
    %v1228 = vsel %vm326, %v1221, 0
    %1230 = vmatprep.subr.mxu0 0.0
    %1231 = vmatpush1.xpose.msra.mxu0 %v1226
    %1232 = vmatprep.subr.mxu0 0.0
    %1233 = vmatpush1.xpose.msra.mxu0 %v1228
    %1234 = vmatprep.subr.mxu0 0.0
    %1235 = vmatpush1.xpose.msra.mxu0 0.0
    %1236 = vmatprep.subr.mxu0 0.0
    %1237 = vmatpush1.xpose.msra.mxu0 0.0
    %1238 = vmatprep.subr.mxu0 0.0
    %1239 = vmatpush1.xpose.msra.mxu0 0.0
    %1240 = vmatprep.subr.mxu0 0.0
    %1241 = vmatpush1.xpose.msra.mxu0 0.0
    %1242 = vmatprep.subr.mxu0 0.0
    %1243 = vmatpush1.xpose.msra.mxu0 0.0
    %1244 = vmatprep.subr.mxu0 0.0
    %1245 = vmatpush1.xpose.msra.mxu0 0.0
    %1246 = vmatprep.subr.mxu0 0.0
    %1247 = vmatpush1.xpose.msra.mxu0 0.0
    %1248 = vmatprep.subr.mxu0 0.0
    %1249 = vmatpush1.xpose.msra.mxu0 0.0
    %1250 = vmatprep.subr.mxu0 0.0
    %1251 = vmatpush1.xpose.msra.mxu0 0.0
    %1252 = vmatprep.subr.mxu0 0.0
    %1253 = vmatpush1.xpose.msra.mxu0 0.0
    %1254 = vmatprep.subr.mxu0 0.0
    %1255 = vmatpush1.xpose.msra.mxu0 0.0
    %1256 = vmatprep.subr.mxu0 0.0
    %1257 = vmatpush1.xpose.msra.mxu0 0.0
    %1258 = vmatprep.subr.mxu0 0.0
    %1259 = vmatpush1.xpose.msra.mxu0 0.0
    %1260 = vmatprep.subr.mxu0 0.0
    %1261 = vmatpush1.xpose.msra.mxu0 0.0
    %1262 = vmatprep.subr.mxu0 0.0
    %1263 = vmatpush1.xpose.msra.mxu0 0.0
    %1264 = vmatprep.subr.mxu0 0.0
    %1265 = vmatpush1.xpose.msra.mxu0 0.0
    %1266 = vmatprep.subr.mxu0 0.0
    %1267 = vmatpush1.xpose.msra.mxu0 0.0
    %1268 = vmatprep.subr.mxu0 0.0
    %1269 = vmatpush1.xpose.msra.mxu0 0.0
    %1270 = vmatprep.subr.mxu0 0.0
    %1271 = vmatpush1.xpose.msra.mxu0 0.0
    %1272 = vmatprep.subr.mxu0 0.0
    %1273 = vmatpush1.xpose.msra.mxu0 0.0
    %1274 = vmatprep.subr.mxu0 0.0
    %1275 = vmatpush1.xpose.msra.mxu0 0.0
    %1276 = vmatprep.subr.mxu0 0.0
    %1277 = vmatpush1.xpose.msra.mxu0 0.0
    %1278 = vmatprep.subr.mxu0 0.0
    %1279 = vmatpush1.xpose.msra.mxu0 0.0
    %1280 = vmatprep.subr.mxu0 0.0
    %1281 = vmatpush1.xpose.msra.mxu0 0.0
    %1282 = vmatprep.subr.mxu0 0.0
    %1283 = vmatpush1.xpose.msra.mxu0 0.0
    %1284 = vmatprep.subr.mxu0 0.0
    %1285 = vmatpush1.xpose.msra.mxu0 0.0
    %1286 = vmatprep.subr.mxu0 0.0
    %1287 = vmatpush1.xpose.msra.mxu0 0.0
    %1288 = vmatprep.subr.mxu0 0.0
    %1289 = vmatpush1.xpose.msra.mxu0 0.0
    %1290 = vmatprep.subr.mxu0 0.0
    %1291 = vmatpush1.xpose.msra.mxu0 0.0
    %1292 = vmatprep.subr.mxu0 0.0
    %1293 = vmatpush1.xpose.msra.mxu0 0.0
    %1294 = vmatprep.mubr.f32.mxu0 0.0
    %1295 = vmatmul.mubr.f32.gmra.mrb[0].mxu0 %v1222
    %v1296 = vpop.f32.mrb[0].mxu0
    %v1297 = vadd.f32 %v178, %v1296
    %v1298 = vpop.f32.mrb[0].mxu0
    %1299 = vmatprep.mubr.f32.mxu0 0.0
    %1300 = vmatmul.mubr.f32.gmra.mrb[0].mxu0 %v1224
    %v1301 = vpop.f32.mrb[0].mxu0
    %v1302 = vadd.f32 %v179, %v1301
    %v1303 = vpop.f32.mrb[0].mxu0
    %1304 = vdwg.mxu0
    %v1305 = vsel %vm326, %v1297, -inf
    %1306 = vmax.xlane.f32.xlu0 %v1305
    %v1307 = vpop.xlane.xlu0 %1306
    %v1308 = vsel %vm326, %v1302, -inf
    %1309 = vmax.xlane.f32.xlu0 %v1308
    %v1310 = vpop.xlane.xlu0 %1309
    %v1311 = vsub.f32 %v1297, %v1307
    %v1312 = vsub.f32 %v1302, %v1310
    %v1313 = vmul.f32 %v1311, 1.442695
    %v1314 = vpow.pop %v1313
    %v1315 = vmul.f32 %v1312, 1.442695
    %v1316 = vpow.pop %v1315
    %v1317 = vsel %vm326, %v1314, 0.0
    %1318 = vadd.xlane.f32.xlu0 %v1317
    %v1319 = vpop.xlane.xlu0 %1318
    %v1320 = vsel %vm326, %v1316, 0.0
    %1321 = vadd.xlane.f32.xlu0 %v1320
    %v1322 = vpop.xlane.xlu0 %1321
    %v1323 = vrcp.pop %v1319
    %v1324 = vmul.f32 %v1314, %v1323
    %v1325 = vrcp.pop %v1322
    %v1326 = vmul.f32 %v1316, %v1325
    %1327 = vrot.lane.b32.xlu0 %v1208, 64
    %v1328 = vpop.permute.xlu0 %1327
    %1329 = vrot.lane.b32.xlu0 %v1213, 64
    %v1330 = vpop.permute.xlu0 %1329
    %v1334 = vsel %vm326, %v1324, 0
    %v1337 = vsel %vm326, %v1326, 0
    %1339 = vmatprep.subr.mxu0 0.0
    %1340 = vmatpush1.msra.mxu0 %v1328
    %1341 = vmatprep.subr.mxu0 0.0
    %1342 = vmatpush1.msra.mxu0 %v1330
    %1343 = vmatprep.subr.mxu0 0.0
    %1344 = vmatpush1.msra.mxu0 0.0
    %1345 = vmatprep.subr.mxu0 0.0
    %1346 = vmatpush1.msra.mxu0 0.0
    %1347 = vmatprep.subr.mxu0 0.0
    %1348 = vmatpush1.msra.mxu0 0.0
    %1349 = vmatprep.subr.mxu0 0.0
    %1350 = vmatpush1.msra.mxu0 0.0
    %1351 = vmatprep.subr.mxu0 0.0
    %1352 = vmatpush1.msra.mxu0 0.0
    %1353 = vmatprep.subr.mxu0 0.0
    %1354 = vmatpush1.msra.mxu0 0.0
    %1355 = vmatprep.subr.mxu0 0.0
    %1356 = vmatpush1.msra.mxu0 0.0
    %1357 = vmatprep.subr.mxu0 0.0
    %1358 = vmatpush1.msra.mxu0 0.0
    %1359 = vmatprep.subr.mxu0 0.0
    %1360 = vmatpush1.msra.mxu0 0.0
    %1361 = vmatprep.subr.mxu0 0.0
    %1362 = vmatpush1.msra.mxu0 0.0
    %1363 = vmatprep.subr.mxu0 0.0
    %1364 = vmatpush1.msra.mxu0 0.0
    %1365 = vmatprep.subr.mxu0 0.0
    %1366 = vmatpush1.msra.mxu0 0.0
    %1367 = vmatprep.subr.mxu0 0.0
    %1368 = vmatpush1.msra.mxu0 0.0
    %1369 = vmatprep.subr.mxu0 0.0
    %1370 = vmatpush1.msra.mxu0 0.0
    %1371 = vmatprep.subr.mxu0 0.0
    %1372 = vmatpush1.msra.mxu0 0.0
    %1373 = vmatprep.subr.mxu0 0.0
    %1374 = vmatpush1.msra.mxu0 0.0
    %1375 = vmatprep.subr.mxu0 0.0
    %1376 = vmatpush1.msra.mxu0 0.0
    %1377 = vmatprep.subr.mxu0 0.0
    %1378 = vmatpush1.msra.mxu0 0.0
    %1379 = vmatprep.subr.mxu0 0.0
    %1380 = vmatpush1.msra.mxu0 0.0
    %1381 = vmatprep.subr.mxu0 0.0
    %1382 = vmatpush1.msra.mxu0 0.0
    %1383 = vmatprep.subr.mxu0 0.0
    %1384 = vmatpush1.msra.mxu0 0.0
    %1385 = vmatprep.subr.mxu0 0.0
    %1386 = vmatpush1.msra.mxu0 0.0
    %1387 = vmatprep.subr.mxu0 0.0
    %1388 = vmatpush1.msra.mxu0 0.0
    %1389 = vmatprep.subr.mxu0 0.0
    %1390 = vmatpush1.msra.mxu0 0.0
    %1391 = vmatprep.subr.mxu0 0.0
    %1392 = vmatpush1.msra.mxu0 0.0
    %1393 = vmatprep.subr.mxu0 0.0
    %1394 = vmatpush1.msra.mxu0 0.0
    %1395 = vmatprep.subr.mxu0 0.0
    %1396 = vmatpush1.msra.mxu0 0.0
    %1397 = vmatprep.subr.mxu0 0.0
    %1398 = vmatpush1.msra.mxu0 0.0
    %1399 = vmatprep.subr.mxu0 0.0
    %1400 = vmatpush1.msra.mxu0 0.0
    %1401 = vmatprep.subr.mxu0 0.0
    %1402 = vmatpush1.msra.mxu0 0.0
    %1403 = vmatprep.mubr.f32.mxu0 0.0
    %1404 = vmatmul.mubr.f32.gmra.mrb[0].mxu0 %v1334
    %v1405 = vpop.f32.mrb[0].mxu0
    %v1406 = vadd.f32 0.0, %v1405
    %v1407 = vpop.f32.mrb[0].mxu0
    %1408 = vmatprep.mubr.f32.mxu0 0.0
    %1409 = vmatmul.mubr.f32.gmra.mrb[0].mxu0 %v1337
    %v1410 = vpop.f32.mrb[0].mxu0
    %v1411 = vadd.f32 0.0, %v1410
    %v1412 = vpop.f32.mrb[0].mxu0
    %1413 = vdwg.mxu0
    %1414 = vrot.lane.b32.xlu0 %v1208, 112
    %v1415 = vpop.permute.xlu0 %1414
    %1416 = vrot.lane.b32.xlu0 %v1213, 112
    %v1417 = vpop.permute.xlu0 %1416
    %1418 = vrot.lane.b32.xlu0 %v1208, 80
    %v1419 = vpop.permute.xlu0 %1418
    %1420 = vrot.lane.b32.xlu0 %v1213, 80
    %v1421 = vpop.permute.xlu0 %1420
    %v1422 = vsel %vm326, %v1415, 0
    %v1424 = vsel %vm326, %v1417, 0
    %v1426 = vsel %vm326, %v1419, 0
    %v1428 = vsel %vm326, %v1421, 0
    %1430 = vmatprep.subr.mxu0 0.0
    %1431 = vmatpush1.xpose.msra.mxu0 %v1426
    %1432 = vmatprep.subr.mxu0 0.0
    %1433 = vmatpush1.xpose.msra.mxu0 %v1428
    %1434 = vmatprep.subr.mxu0 0.0
    %1435 = vmatpush1.xpose.msra.mxu0 0.0
    %1436 = vmatprep.subr.mxu0 0.0
    %1437 = vmatpush1.xpose.msra.mxu0 0.0
    %1438 = vmatprep.subr.mxu0 0.0
    %1439 = vmatpush1.xpose.msra.mxu0 0.0
    %1440 = vmatprep.subr.mxu0 0.0
    %1441 = vmatpush1.xpose.msra.mxu0 0.0
    %1442 = vmatprep.subr.mxu0 0.0
    %1443 = vmatpush1.xpose.msra.mxu0 0.0
    %1444 = vmatprep.subr.mxu0 0.0
    %1445 = vmatpush1.xpose.msra.mxu0 0.0
    %1446 = vmatprep.subr.mxu0 0.0
    %1447 = vmatpush1.xpose.msra.mxu0 0.0
    %1448 = vmatprep.subr.mxu0 0.0
    %1449 = vmatpush1.xpose.msra.mxu0 0.0
    %1450 = vmatprep.subr.mxu0 0.0
    %1451 = vmatpush1.xpose.msra.mxu0 0.0
    %1452 = vmatprep.subr.mxu0 0.0
    %1453 = vmatpush1.xpose.msra.mxu0 0.0
    %1454 = vmatprep.subr.mxu0 0.0
    %1455 = vmatpush1.xpose.msra.mxu0 0.0
    %1456 = vmatprep.subr.mxu0 0.0
    %1457 = vmatpush1.xpose.msra.mxu0 0.0
    %1458 = vmatprep.subr.mxu0 0.0
    %1459 = vmatpush1.xpose.msra.mxu0 0.0
    %1460 = vmatprep.subr.mxu0 0.0
    %1461 = vmatpush1.xpose.msra.mxu0 0.0
    %1462 = vmatprep.subr.mxu0 0.0
    %1463 = vmatpush1.xpose.msra.mxu0 0.0
    %1464 = vmatprep.subr.mxu0 0.0
    %1465 = vmatpush1.xpose.msra.mxu0 0.0
    %1466 = vmatprep.subr.mxu0 0.0
    %1467 = vmatpush1.xpose.msra.mxu0 0.0
    %1468 = vmatprep.subr.mxu0 0.0
    %1469 = vmatpush1.xpose.msra.mxu0 0.0
    %1470 = vmatprep.subr.mxu0 0.0
    %1471 = vmatpush1.xpose.msra.mxu0 0.0
    %1472 = vmatprep.subr.mxu0 0.0
    %1473 = vmatpush1.xpose.msra.mxu0 0.0
    %1474 = vmatprep.subr.mxu0 0.0
    %1475 = vmatpush1.xpose.msra.mxu0 0.0
    %1476 = vmatprep.subr.mxu0 0.0
    %1477 = vmatpush1.xpose.msra.mxu0 0.0
    %1478 = vmatprep.subr.mxu0 0.0
    %1479 = vmatpush1.xpose.msra.mxu0 0.0
    %1480 = vmatprep.subr.mxu0 0.0
    %1481 = vmatpush1.xpose.msra.mxu0 0.0
    %1482 = vmatprep.subr.mxu0 0.0
    %1483 = vmatpush1.xpose.msra.mxu0 0.0
    %1484 = vmatprep.subr.mxu0 0.0
    %1485 = vmatpush1.xpose.msra.mxu0 0.0
    %1486 = vmatprep.subr.mxu0 0.0
    %1487 = vmatpush1.xpose.msra.mxu0 0.0
    %1488 = vmatprep.subr.mxu0 0.0
    %1489 = vmatpush1.xpose.msra.mxu0 0.0
    %1490 = vmatprep.subr.mxu0 0.0
    %1491 = vmatpush1.xpose.msra.mxu0 0.0
    %1492 = vmatprep.subr.mxu0 0.0
    %1493 = vmatpush1.xpose.msra.mxu0 0.0
    %1494 = vmatprep.mubr.f32.mxu0 0.0
    %1495 = vmatmul.mubr.f32.gmra.mrb[0].mxu0 %v1422
    %v1496 = vpop.f32.mrb[0].mxu0
    %v1497 = vadd.f32 %v178, %v1496
    %v1498 = vpop.f32.mrb[0].mxu0
    %1499 = vmatprep.mubr.f32.mxu0 0.0
    %1500 = vmatmul.mubr.f32.gmra.mrb[0].mxu0 %v1424
    %v1501 = vpop.f32.mrb[0].mxu0
    %v1502 = vadd.f32 %v179, %v1501
    %v1503 = vpop.f32.mrb[0].mxu0
    %1504 = vdwg.mxu0
    %v1505 = vsel %vm326, %v1497, -inf
    %1506 = vmax.xlane.f32.xlu0 %v1505
    %v1507 = vpop.xlane.xlu0 %1506
    %v1508 = vsel %vm326, %v1502, -inf
    %1509 = vmax.xlane.f32.xlu0 %v1508
    %v1510 = vpop.xlane.xlu0 %1509
    %v1511 = vsub.f32 %v1497, %v1507
    %v1512 = vsub.f32 %v1502, %v1510
    %v1513 = vmul.f32 %v1511, 1.442695
    %v1514 = vpow.pop %v1513
    %v1515 = vmul.f32 %v1512, 1.442695
    %v1516 = vpow.pop %v1515
    %v1517 = vsel %vm326, %v1514, 0.0
    %1518 = vadd.xlane.f32.xlu0 %v1517
    %v1519 = vpop.xlane.xlu0 %1518
    %v1520 = vsel %vm326, %v1516, 0.0
    %1521 = vadd.xlane.f32.xlu0 %v1520
    %v1522 = vpop.xlane.xlu0 %1521
    %v1523 = vrcp.pop %v1519
    %v1524 = vmul.f32 %v1514, %v1523
    %v1525 = vrcp.pop %v1522
    %v1526 = vmul.f32 %v1516, %v1525
    %1527 = vrot.lane.b32.xlu0 %v1208, 48
    %v1528 = vpop.permute.xlu0 %1527
    %1529 = vrot.lane.b32.xlu0 %v1213, 48
    %v1530 = vpop.permute.xlu0 %1529
    %v1534 = vsel %vm326, %v1524, 0
    %v1537 = vsel %vm326, %v1526, 0
    %1539 = vmatprep.subr.mxu0 0.0
    %1540 = vmatpush1.msra.mxu0 %v1528
    %1541 = vmatprep.subr.mxu0 0.0
    %1542 = vmatpush1.msra.mxu0 %v1530
    %1543 = vmatprep.subr.mxu0 0.0
    %1544 = vmatpush1.msra.mxu0 0.0
    %1545 = vmatprep.subr.mxu0 0.0
    %1546 = vmatpush1.msra.mxu0 0.0
    %1547 = vmatprep.subr.mxu0 0.0
    %1548 = vmatpush1.msra.mxu0 0.0
    %1549 = vmatprep.subr.mxu0 0.0
    %1550 = vmatpush1.msra.mxu0 0.0
    %1551 = vmatprep.subr.mxu0 0.0
    %1552 = vmatpush1.msra.mxu0 0.0
    %1553 = vmatprep.subr.mxu0 0.0
    %1554 = vmatpush1.msra.mxu0 0.0
    %1555 = vmatprep.subr.mxu0 0.0
    %1556 = vmatpush1.msra.mxu0 0.0
    %1557 = vmatprep.subr.mxu0 0.0
    %1558 = vmatpush1.msra.mxu0 0.0
    %1559 = vmatprep.subr.mxu0 0.0
    %1560 = vmatpush1.msra.mxu0 0.0
    %1561 = vmatprep.subr.mxu0 0.0
    %1562 = vmatpush1.msra.mxu0 0.0
    %1563 = vmatprep.subr.mxu0 0.0
    %1564 = vmatpush1.msra.mxu0 0.0
    %1565 = vmatprep.subr.mxu0 0.0
    %1566 = vmatpush1.msra.mxu0 0.0
    %1567 = vmatprep.subr.mxu0 0.0
    %1568 = vmatpush1.msra.mxu0 0.0
    %1569 = vmatprep.subr.mxu0 0.0
    %1570 = vmatpush1.msra.mxu0 0.0
    %1571 = vmatprep.subr.mxu0 0.0
    %1572 = vmatpush1.msra.mxu0 0.0
    %1573 = vmatprep.subr.mxu0 0.0
    %1574 = vmatpush1.msra.mxu0 0.0
    %1575 = vmatprep.subr.mxu0 0.0
    %1576 = vmatpush1.msra.mxu0 0.0
    %1577 = vmatprep.subr.mxu0 0.0
    %1578 = vmatpush1.msra.mxu0 0.0
    %1579 = vmatprep.subr.mxu0 0.0
    %1580 = vmatpush1.msra.mxu0 0.0
    %1581 = vmatprep.subr.mxu0 0.0
    %1582 = vmatpush1.msra.mxu0 0.0
    %1583 = vmatprep.subr.mxu0 0.0
    %1584 = vmatpush1.msra.mxu0 0.0
    %1585 = vmatprep.subr.mxu0 0.0
    %1586 = vmatpush1.msra.mxu0 0.0
    %1587 = vmatprep.subr.mxu0 0.0
    %1588 = vmatpush1.msra.mxu0 0.0
    %1589 = vmatprep.subr.mxu0 0.0
    %1590 = vmatpush1.msra.mxu0 0.0
    %1591 = vmatprep.subr.mxu0 0.0
    %1592 = vmatpush1.msra.mxu0 0.0
    %1593 = vmatprep.subr.mxu0 0.0
    %1594 = vmatpush1.msra.mxu0 0.0
    %1595 = vmatprep.subr.mxu0 0.0
    %1596 = vmatpush1.msra.mxu0 0.0
    %1597 = vmatprep.subr.mxu0 0.0
    %1598 = vmatpush1.msra.mxu0 0.0
    %1599 = vmatprep.subr.mxu0 0.0
    %1600 = vmatpush1.msra.mxu0 0.0
    %1601 = vmatprep.subr.mxu0 0.0
    %1602 = vmatpush1.msra.mxu0 0.0
    %1603 = vmatprep.mubr.f32.mxu0 0.0
    %1604 = vmatmul.mubr.f32.gmra.mrb[0].mxu0 %v1534
    %v1605 = vpop.f32.mrb[0].mxu0
    %v1606 = vadd.f32 0.0, %v1605
    %v1607 = vpop.f32.mrb[0].mxu0
    %1608 = vmatprep.mubr.f32.mxu0 0.0
    %1609 = vmatmul.mubr.f32.gmra.mrb[0].mxu0 %v1537
    %v1610 = vpop.f32.mrb[0].mxu0
    %v1611 = vadd.f32 0.0, %v1610
    %v1612 = vpop.f32.mrb[0].mxu0
    %1613 = vdwg.mxu0
    %1616 = vrot.lane.b32.xlu0 %v1606, 16
    %v1617 = vpop.permute.xlu0 %1616
    %1618 = vrot.lane.b32.xlu0 %v1611, 16
    %v1619 = vpop.permute.xlu0 %1618
    %v1622 = vsel %vm326, %v1406, %v1617
    %v1623 = vsel %vm326, %v1411, %v1619
    %s1624 = scalar_lea.vmem %s8, 32
    %v1625 = vld [vmem:[%s1624] sm:$0xff]
    %v1626 = vld [vmem:[%s1624 + $0x8] sm:$0xff]
    %v1627 = vld [vmem:[%s1624 + $0x10] sm:$0xff]
    %v1628 = vld [vmem:[%s1624 + $0x18] sm:$0xff]
    %s1629 = scalar_lea.vmem %s9, 1
    %v1630 = vld [vmem:[%s1629] sm:$0x1]
    %v1632 = vlaneseq
    %v1633 = vshrl.u32 %v1632, 7
    %v1634 = vsub.s32 0, %v1633
    %v1635 = vrot.slane %v1630, %v1634
    %v1638 = vsel %vm184, %v1622, 0
    %v1641 = vsel %vm184, %v1623, 0
    %1643 = vmatprep.subr.mxu0 0.0
    %1644 = vmatpush1.msra.mxu0 %v1625
    %1645 = vmatprep.subr.mxu0 0.0
    %1646 = vmatpush1.msra.mxu0 %v1626
    %1647 = vmatprep.subr.mxu0 0.0
    %1648 = vmatpush1.msra.mxu0 %v1627
    %1649 = vmatprep.subr.mxu0 0.0
    %1650 = vmatpush1.msra.mxu0 %v1628
    %1651 = vmatprep.subr.mxu0 0.0
    %1652 = vmatpush1.msra.mxu0 0.0
    %1653 = vmatprep.subr.mxu0 0.0
    %1654 = vmatpush1.msra.mxu0 0.0
    %1655 = vmatprep.subr.mxu0 0.0
    %1656 = vmatpush1.msra.mxu0 0.0
    %1657 = vmatprep.subr.mxu0 0.0
    %1658 = vmatpush1.msra.mxu0 0.0
    %1659 = vmatprep.subr.mxu0 0.0
    %1660 = vmatpush1.msra.mxu0 0.0
    %1661 = vmatprep.subr.mxu0 0.0
    %1662 = vmatpush1.msra.mxu0 0.0
    %1663 = vmatprep.subr.mxu0 0.0
    %1664 = vmatpush1.msra.mxu0 0.0
    %1665 = vmatprep.subr.mxu0 0.0
    %1666 = vmatpush1.msra.mxu0 0.0
    %1667 = vmatprep.subr.mxu0 0.0
    %1668 = vmatpush1.msra.mxu0 0.0
    %1669 = vmatprep.subr.mxu0 0.0
    %1670 = vmatpush1.msra.mxu0 0.0
    %1671 = vmatprep.subr.mxu0 0.0
    %1672 = vmatpush1.msra.mxu0 0.0
    %1673 = vmatprep.subr.mxu0 0.0
    %1674 = vmatpush1.msra.mxu0 0.0
    %1675 = vmatprep.subr.mxu0 0.0
    %1676 = vmatpush1.msra.mxu0 0.0
    %1677 = vmatprep.subr.mxu0 0.0
    %1678 = vmatpush1.msra.mxu0 0.0
    %1679 = vmatprep.subr.mxu0 0.0
    %1680 = vmatpush1.msra.mxu0 0.0
    %1681 = vmatprep.subr.mxu0 0.0
    %1682 = vmatpush1.msra.mxu0 0.0
    %1683 = vmatprep.subr.mxu0 0.0
    %1684 = vmatpush1.msra.mxu0 0.0
    %1685 = vmatprep.subr.mxu0 0.0
    %1686 = vmatpush1.msra.mxu0 0.0
    %1687 = vmatprep.subr.mxu0 0.0
    %1688 = vmatpush1.msra.mxu0 0.0
    %1689 = vmatprep.subr.mxu0 0.0
    %1690 = vmatpush1.msra.mxu0 0.0
    %1691 = vmatprep.subr.mxu0 0.0
    %1692 = vmatpush1.msra.mxu0 0.0
    %1693 = vmatprep.subr.mxu0 0.0
    %1694 = vmatpush1.msra.mxu0 0.0
    %1695 = vmatprep.subr.mxu0 0.0
    %1696 = vmatpush1.msra.mxu0 0.0
    %1697 = vmatprep.subr.mxu0 0.0
    %1698 = vmatpush1.msra.mxu0 0.0
    %1699 = vmatprep.subr.mxu0 0.0
    %1700 = vmatpush1.msra.mxu0 0.0
    %1701 = vmatprep.subr.mxu0 0.0
    %1702 = vmatpush1.msra.mxu0 0.0
    %1703 = vmatprep.subr.mxu0 0.0
    %1704 = vmatpush1.msra.mxu0 0.0
    %1705 = vmatprep.subr.mxu0 0.0
    %1706 = vmatpush1.msra.mxu0 0.0
    %1707 = vmatprep.mubr.f32.mxu0 0.0
    %1708 = vmatmul.mubr.f32.gmra.mrb[0].mxu0 %v1638
    %v1709 = vpop.f32.mrb[0].mxu0
    %v1710 = vadd.f32 %v1635, %v1709
    %v1711 = vpop.f32.mrb[0].mxu0
    %1712 = vmatprep.mubr.f32.mxu0 0.0
    %1713 = vmatmul.mubr.f32.gmra.mrb[0].mxu0 %v1641
    %v1714 = vpop.f32.mrb[0].mxu0
    %v1715 = vadd.f32 %v1635, %v1714
    %v1716 = vpop.f32.mrb[0].mxu0
    %1717 = vdwg.mxu0
    %v1718 = vadd.f32 %v1118, %v1710
    %v1719 = vadd.f32 %v1119, %v1715
    %s1720 = scalar_lea.vmem %s10, 1
    %v1721 = vld [vmem:[%s1720] sm:$0x1]
    %s1722 = scalar_lea.vmem [#allocation11], 1
    %v1723 = vld [vmem:[%s1722] sm:$0x1]
    %v1724 = vsel %vm184, %v1718, 0.0
    %1725 = vadd.xlane.f32.xlu0 %v1724
    %v1726 = vpop.xlane.xlu0 %1725
    %v1727 = vsel %vm184, %v1719, 0.0
    %1728 = vadd.xlane.f32.xlu0 %v1727
    %v1729 = vpop.xlane.xlu0 %1728
    %v1730 = vmul.f32 %v1726, %v191
    %v1731 = vmul.f32 %v1729, %v191
    %v1732 = vsub.f32 %v1718, %v1730
    %v1733 = vsub.f32 %v1719, %v1731
    %v1734 = vmul.f32 %v1732, %v1732
    %v1735 = vmul.f32 %v1733, %v1733
    %v1736 = vsel %vm184, %v1734, 0.0
    %1737 = vadd.xlane.f32.xlu0 %v1736
    %v1738 = vpop.xlane.xlu0 %1737
    %v1739 = vsel %vm184, %v1735, 0.0
    %1740 = vadd.xlane.f32.xlu0 %v1739
    %v1741 = vpop.xlane.xlu0 %1740
    %v1742 = vmul.f32 %v1738, %v191
    %v1743 = vmul.f32 %v1741, %v191
    %v1744 = vadd.f32 %v1742, 1e-12
    %v1745 = vadd.f32 %v1743, 1e-12
    %v1746 = vrsqrt.pop %v1744
    %v1747 = vrsqrt.pop %v1745
    %v1748 = vmul.f32 %v1732, %v1746
    %v1749 = vmul.f32 %v1733, %v1747
    %v1751 = vlaneseq
    %v1752 = vshrl.u32 %v1751, 7
    %v1753 = vsub.s32 0, %v1752
    %v1754 = vrot.slane %v1721, %v1753
    %v1756 = vmul.f32 %v1748, %v1754
    %v1757 = vmul.f32 %v1749, %v1754
    %v1759 = vlaneseq
    %v1760 = vshrl.u32 %v1759, 7
    %v1761 = vsub.s32 0, %v1760
    %v1762 = vrot.slane %v1723, %v1761
    %v1764 = vadd.f32 %v1756, %v1762
    %v1765 = vadd.f32 %v1757, %v1762
    %s1766 = scalar_lea.vmem %s12, 32
    %v1767 = vld [vmem:[%s1766] sm:$0xff]
    %v1768 = vld [vmem:[%s1766 + $0x8] sm:$0xff]
    %v1769 = vld [vmem:[%s1766 + $0x10] sm:$0xff]
    %v1770 = vld [vmem:[%s1766 + $0x18] sm:$0xff]
    %s1771 = scalar_lea.vmem [#allocation13], 1
    %v1772 = vld [vmem:[%s1771] sm:$0x1]
    %v1774 = vlaneseq
    %v1775 = vshrl.u32 %v1774, 7
    %v1776 = vsub.s32 0, %v1775
    %v1777 = vrot.slane %v1772, %v1776
    %v1780 = vsel %vm184, %v1764, 0
    %v1783 = vsel %vm184, %v1765, 0
    %1785 = vmatprep.subr.mxu0 0.0
    %1786 = vmatpush1.msra.mxu0 %v1767
    %1787 = vmatprep.subr.mxu0 0.0
    %1788 = vmatpush1.msra.mxu0 %v1768
    %1789 = vmatprep.subr.mxu0 0.0
    %1790 = vmatpush1.msra.mxu0 %v1769
    %1791 = vmatprep.subr.mxu0 0.0
    %1792 = vmatpush1.msra.mxu0 %v1770
    %1793 = vmatprep.subr.mxu0 0.0
    %1794 = vmatpush1.msra.mxu0 0.0
    %1795 = vmatprep.subr.mxu0 0.0
    %1796 = vmatpush1.msra.mxu0 0.0
    %1797 = vmatprep.subr.mxu0 0.0
    %1798 = vmatpush1.msra.mxu0 0.0
    %1799 = vmatprep.subr.mxu0 0.0
    %1800 = vmatpush1.msra.mxu0 0.0
    %1801 = vmatprep.subr.mxu0 0.0
    %1802 = vmatpush1.msra.mxu0 0.0
    %1803 = vmatprep.subr.mxu0 0.0
    %1804 = vmatpush1.msra.mxu0 0.0
    %1805 = vmatprep.subr.mxu0 0.0
    %1806 = vmatpush1.msra.mxu0 0.0
    %1807 = vmatprep.subr.mxu0 0.0
    %1808 = vmatpush1.msra.mxu0 0.0
    %1809 = vmatprep.subr.mxu0 0.0
    %1810 = vmatpush1.msra.mxu0 0.0
    %1811 = vmatprep.subr.mxu0 0.0
    %1812 = vmatpush1.msra.mxu0 0.0
    %1813 = vmatprep.subr.mxu0 0.0
    %1814 = vmatpush1.msra.mxu0 0.0
    %1815 = vmatprep.subr.mxu0 0.0
    %1816 = vmatpush1.msra.mxu0 0.0
    %1817 = vmatprep.subr.mxu0 0.0
    %1818 = vmatpush1.msra.mxu0 0.0
    %1819 = vmatprep.subr.mxu0 0.0
    %1820 = vmatpush1.msra.mxu0 0.0
    %1821 = vmatprep.subr.mxu0 0.0
    %1822 = vmatpush1.msra.mxu0 0.0
    %1823 = vmatprep.subr.mxu0 0.0
    %1824 = vmatpush1.msra.mxu0 0.0
    %1825 = vmatprep.subr.mxu0 0.0
    %1826 = vmatpush1.msra.mxu0 0.0
    %1827 = vmatprep.subr.mxu0 0.0
    %1828 = vmatpush1.msra.mxu0 0.0
    %1829 = vmatprep.subr.mxu0 0.0
    %1830 = vmatpush1.msra.mxu0 0.0
    %1831 = vmatprep.subr.mxu0 0.0
    %1832 = vmatpush1.msra.mxu0 0.0
    %1833 = vmatprep.subr.mxu0 0.0
    %1834 = vmatpush1.msra.mxu0 0.0
    %1835 = vmatprep.subr.mxu0 0.0
    %1836 = vmatpush1.msra.mxu0 0.0
    %1837 = vmatprep.subr.mxu0 0.0
    %1838 = vmatpush1.msra.mxu0 0.0
    %1839 = vmatprep.subr.mxu0 0.0
    %1840 = vmatpush1.msra.mxu0 0.0
    %1841 = vmatprep.subr.mxu0 0.0
    %1842 = vmatpush1.msra.mxu0 0.0
    %1843 = vmatprep.subr.mxu0 0.0
    %1844 = vmatpush1.msra.mxu0 0.0
    %1845 = vmatprep.subr.mxu0 0.0
    %1846 = vmatpush1.msra.mxu0 0.0
    %1847 = vmatprep.subr.mxu0 0.0
    %1848 = vmatpush1.msra.mxu0 0.0
    %1849 = vmatprep.mubr.f32.mxu0 0.0
    %1850 = vmatmul.mubr.f32.gmra.mrb[0].mxu0 %v1780
    %v1851 = vpop.f32.mrb[0].mxu0
    %v1852 = vadd.f32 %v1777, %v1851
    %v1853 = vpop.f32.mrb[0].mxu0
    %1854 = vmatprep.mubr.f32.mxu0 0.0
    %1855 = vmatmul.mubr.f32.gmra.mrb[0].mxu0 %v1783
    %v1856 = vpop.f32.mrb[0].mxu0
    %v1857 = vadd.f32 %v1777, %v1856
    %v1858 = vpop.f32.mrb[0].mxu0
    %1859 = vdwg.mxu0
    %v1860 = vmul.f32 %v1852, %v1852
    %v1861 = vmul.f32 %v1857, %v1857
    %v1862 = vmul.f32 %v1852, %v1860
    %v1863 = vmul.f32 %v1857, %v1861
    %v1864 = vmul.f32 %v1862, 0.044715
    %v1865 = vmul.f32 %v1863, 0.044715
    %v1866 = vadd.f32 %v1852, %v1864
    %v1867 = vadd.f32 %v1857, %v1865
    %v1868 = vmul.f32 %v1866, 0.7978846
    %v1869 = vmul.f32 %v1867, 0.7978846
    %v1870 = vtanh.pop %v1868
    %v1871 = vtanh.pop %v1869
    %v1872 = vadd.f32 %v1870, 1.0
    %v1873 = vadd.f32 %v1871, 1.0
    %v1874 = vmul.f32 %v1872, 0.5
    %v1875 = vmul.f32 %v1873, 0.5
    %v1876 = vmul.f32 %v1852, %v1874
    %v1877 = vmul.f32 %v1857, %v1875
    %s1878 = scalar_lea.vmem %s14, 64
    %v1879 = vld [vmem:[%s1878] sm:$0xff]
    %v1880 = vld [vmem:[%s1878 + $0x8] sm:$0xff]
    %v1881 = vld [vmem:[%s1878 + $0x10] sm:$0xff]
    %v1882 = vld [vmem:[%s1878 + $0x18] sm:$0xff]
    %v1883 = vld [vmem:[%s1878 + $0x20] sm:$0xff]
    %v1884 = vld [vmem:[%s1878 + $0x28] sm:$0xff]
    %v1885 = vld [vmem:[%s1878 + $0x30] sm:$0xff]
    %v1886 = vld [vmem:[%s1878 + $0x38] sm:$0xff]
    %s1887 = scalar_lea.vmem %s15, 1
    %v1888 = vld [vmem:[%s1887] sm:$0x1]
    %v1890 = vlaneseq
    %v1891 = vshrl.u32 %v1890, 7
    %v1892 = vsub.s32 0, %v1891
    %v1893 = vrot.slane %v1888, %v1892
    %v1896 = vsel %vm992, %v1876, 0
    %v1899 = vsel %vm992, %v1877, 0
    %1901 = vmatprep.subr.mxu0 0.0
    %1902 = vmatpush1.msra.mxu0 %v1879
    %1903 = vmatprep.subr.mxu0 0.0
    %1904 = vmatpush1.msra.mxu0 %v1880
    %1905 = vmatprep.subr.mxu0 0.0
    %1906 = vmatpush1.msra.mxu0 %v1881
    %1907 = vmatprep.subr.mxu0 0.0
    %1908 = vmatpush1.msra.mxu0 %v1882
    %1909 = vmatprep.subr.mxu0 0.0
    %1910 = vmatpush1.msra.mxu0 %v1883
    %1911 = vmatprep.subr.mxu0 0.0
    %1912 = vmatpush1.msra.mxu0 %v1884
    %1913 = vmatprep.subr.mxu0 0.0
    %1914 = vmatpush1.msra.mxu0 %v1885
    %1915 = vmatprep.subr.mxu0 0.0
    %1916 = vmatpush1.msra.mxu0 %v1886
    %1917 = vmatprep.subr.mxu0 0.0
    %1918 = vmatpush1.msra.mxu0 0.0
    %1919 = vmatprep.subr.mxu0 0.0
    %1920 = vmatpush1.msra.mxu0 0.0
    %1921 = vmatprep.subr.mxu0 0.0
    %1922 = vmatpush1.msra.mxu0 0.0
    %1923 = vmatprep.subr.mxu0 0.0
    %1924 = vmatpush1.msra.mxu0 0.0
    %1925 = vmatprep.subr.mxu0 0.0
    %1926 = vmatpush1.msra.mxu0 0.0
    %1927 = vmatprep.subr.mxu0 0.0
    %1928 = vmatpush1.msra.mxu0 0.0
    %1929 = vmatprep.subr.mxu0 0.0
    %1930 = vmatpush1.msra.mxu0 0.0
    %1931 = vmatprep.subr.mxu0 0.0
    %1932 = vmatpush1.msra.mxu0 0.0
    %1933 = vmatprep.subr.mxu0 0.0
    %1934 = vmatpush1.msra.mxu0 0.0
    %1935 = vmatprep.subr.mxu0 0.0
    %1936 = vmatpush1.msra.mxu0 0.0
    %1937 = vmatprep.subr.mxu0 0.0
    %1938 = vmatpush1.msra.mxu0 0.0
    %1939 = vmatprep.subr.mxu0 0.0
    %1940 = vmatpush1.msra.mxu0 0.0
    %1941 = vmatprep.subr.mxu0 0.0
    %1942 = vmatpush1.msra.mxu0 0.0
    %1943 = vmatprep.subr.mxu0 0.0
    %1944 = vmatpush1.msra.mxu0 0.0
    %1945 = vmatprep.subr.mxu0 0.0
    %1946 = vmatpush1.msra.mxu0 0.0
    %1947 = vmatprep.subr.mxu0 0.0
    %1948 = vmatpush1.msra.mxu0 0.0
    %1949 = vmatprep.subr.mxu0 0.0
    %1950 = vmatpush1.msra.mxu0 0.0
    %1951 = vmatprep.subr.mxu0 0.0
    %1952 = vmatpush1.msra.mxu0 0.0
    %1953 = vmatprep.subr.mxu0 0.0
    %1954 = vmatpush1.msra.mxu0 0.0
    %1955 = vmatprep.subr.mxu0 0.0
    %1956 = vmatpush1.msra.mxu0 0.0
    %1957 = vmatprep.subr.mxu0 0.0
    %1958 = vmatpush1.msra.mxu0 0.0
    %1959 = vmatprep.subr.mxu0 0.0
    %1960 = vmatpush1.msra.mxu0 0.0
    %1961 = vmatprep.subr.mxu0 0.0
    %1962 = vmatpush1.msra.mxu0 0.0
    %1963 = vmatprep.subr.mxu0 0.0
    %1964 = vmatpush1.msra.mxu0 0.0
    %1965 = vmatprep.mubr.f32.mxu0 0.0
    %1966 = vmatmul.mubr.f32.gmra.mrb[0].mxu0 %v1896
    %v1967 = vpop.f32.mrb[0].mxu0
    %v1968 = vadd.f32 %v1893, %v1967
    %v1969 = vpop.f32.mrb[0].mxu0
    %1970 = vmatprep.mubr.f32.mxu0 0.0
    %1971 = vmatmul.mubr.f32.gmra.mrb[0].mxu0 %v1899
    %v1972 = vpop.f32.mrb[0].mxu0
    %v1973 = vadd.f32 %v1893, %v1972
    %v1974 = vpop.f32.mrb[0].mxu0
    %1975 = vdwg.mxu0
    %v1976 = vadd.f32 %v1764, %v1968
    %v1977 = vadd.f32 %v1765, %v1973
    %s1978 = scalar_lea.vmem %s16, 1
    %v1979 = vld [vmem:[%s1978] sm:$0x1]
    %s1980 = scalar_lea.vmem %s17, 1
    %v1981 = vld [vmem:[%s1980] sm:$0x1]
    %v1982 = vsel %vm184, %v1976, 0.0
    %1983 = vadd.xlane.f32.xlu0 %v1982
    %v1984 = vpop.xlane.xlu0 %1983
    %v1985 = vsel %vm184, %v1977, 0.0
    %1986 = vadd.xlane.f32.xlu0 %v1985
    %v1987 = vpop.xlane.xlu0 %1986
    %v1988 = vmul.f32 %v1984, %v191
    %v1989 = vmul.f32 %v1987, %v191
    %v1990 = vsub.f32 %v1976, %v1988
    %v1991 = vsub.f32 %v1977, %v1989
    %v1992 = vmul.f32 %v1990, %v1990
    %v1993 = vmul.f32 %v1991, %v1991
    %v1994 = vsel %vm184, %v1992, 0.0
    %1995 = vadd.xlane.f32.xlu0 %v1994
    %v1996 = vpop.xlane.xlu0 %1995
    %v1997 = vsel %vm184, %v1993, 0.0
    %1998 = vadd.xlane.f32.xlu0 %v1997
    %v1999 = vpop.xlane.xlu0 %1998
    %v2000 = vmul.f32 %v1996, %v191
    %v2001 = vmul.f32 %v1999, %v191
    %v2002 = vadd.f32 %v2000, 1e-12
    %v2003 = vadd.f32 %v2001, 1e-12
    %v2004 = vrsqrt.pop %v2002
    %v2005 = vrsqrt.pop %v2003
    %v2006 = vmul.f32 %v1990, %v2004
    %v2007 = vmul.f32 %v1991, %v2005
    %v2009 = vlaneseq
    %v2010 = vshrl.u32 %v2009, 7
    %v2011 = vsub.s32 0, %v2010
    %v2012 = vrot.slane %v1979, %v2011
    %v2014 = vmul.f32 %v2006, %v2012
    %v2015 = vmul.f32 %v2007, %v2012
    %v2017 = vlaneseq
    %v2018 = vshrl.u32 %v2017, 7
    %v2019 = vsub.s32 0, %v2018
    %v2020 = vrot.slane %v1981, %v2019
    %v2022 = vadd.f32 %v2014, %v2020
    %v2023 = vadd.f32 %v2015, %v2020
    %v2024 = vadd.f32 %v1120, %v2022
    %v2025 = vadd.f32 %v1121, %v2023
    %v2026 = vmul.f32 %v2024, 0.33333334
    %v2027 = vmul.f32 %v2025, 0.33333334
    %2028 = vst.msk [vmem:[#allocation14] sm:$0xff] %vm184, %v2026
    %2029 = vst.msk [vmem:[#allocation14 + $0x8] sm:$0xff] %vm184, %v2027
    // Predicated region
    $region102: #{tpu_custom_call.1} parent=1 // pred_check
      _
    $region103: #{tpu_custom_call.1} parent=1 // pred_check_branch
      %2031 = sbr.rel (0) target = $region105
    $region104: #{tpu_custom_call.1} parent=1 // pred_region
      %s2033 = ssub.s32 256, 256
      %2034 = vsyncadd [#allocation4], %s2033
      %s2035 = sshll.u32 [#allocation14], 4
      %s2036 = int_to_ptr.vmem [resolvable:$true] %s2035
      %2041 = dma.vmem_to_hbm [thread:$0]  %s2036, 256, %s18, [#allocation4], 128, 128, 8
    $region105: #{tpu_custom_call.1} parent=1 // pred_fallthru
      _
    // Predicated region
    $region106: #{tpu_custom_call.1} parent=1 // pred_check
      _
    $region107: #{tpu_custom_call.1} parent=1 // pred_check_branch
      %2043 = sbr.rel (0) target = $region109
    $region108: #{tpu_custom_call.1} parent=1 // pred_region
      %2044 = dma.done [#allocation4], 256
    $region109: #{tpu_custom_call.1} parent=1 // pred_fallthru
      _
    %2045 = vsyncpa [#allocation3], 1
    %2046 = vsyncpa [#allocation6], 1
    %2047 = vsyncpa [#allocation9], 1
    %2048 = vsyncpa [#allocation12], 1
    %2049 = vsyncpa [#allocation4], 1

</llo_original>
